<compile_context>
chip_gen: v7x
topology: tpu7x:2x2x1
jax: 0.10.0
libtpu: 0.0.40
codegen_flags: <defaults>
</compile_context>

<pallas_src>
import functools
import math

import jax
import jax.numpy as jnp
from jax.experimental import pallas as pl
from jax.experimental.pallas import tpu as pltpu


# ---------------------------------------------------------------------------
# VMEM budgeting (chip aware: v7x has 64 MiB physical VMEM, v5e/v6e 128 MiB).
# ---------------------------------------------------------------------------
def _vmem_limit_bytes():
    cap = 64 * 1024 * 1024                      # conservative default (v7x)
    try:
        info = pltpu.get_tpu_info()
        cap = int(getattr(info, "vmem_capacity_bytes", cap))
    except Exception:
        pass
    # ~3/4 of physical as the scoped limit, clamped to [32 MiB, 96 MiB].
    return int(max(32 * 1024 * 1024, min((cap * 3) // 4, 96 * 1024 * 1024)))


_VMEM_LIMIT = _vmem_limit_bytes()
# Per-tile budget: in + out tiles, each double-buffered => ~4x tile bytes live,
# plus headroom => limit // 6   (~8 MiB on v7x, ~16 MiB on v5e/v6e).
_TILE_BUDGET = max(2 * 1024 * 1024, _VMEM_LIMIT // 6)


def _cdiv(a, b):
    return -(-a // b)


def _sublane_align(dtype):
    # f32 -> 8, bf16/f16 -> 16, int8/fp8 -> 32 (sub-32-bit dtypes pack sublanes).
    return 8 * max(1, 4 // jnp.dtype(dtype).itemsize)


def _aligned_tile(size, align, max_elems):
    """Tile for one dim: full extent if it fits the element budget (full-extent
    blocks are always layout-legal), else the largest multiple of `align` that
    fits (boundary blocks are handled by Pallas masking)."""
    if size <= max_elems or size <= align:
        return size
    return max(align, (max_elems // align) * align)


def _cost(x):
    nbytes = x.size * jnp.dtype(x.dtype).itemsize
    return pl.CostEstimate(flops=0, transcendentals=0, bytes_accessed=2 * nbytes)


def _params(n_axes):
    return pltpu.CompilerParams(
        dimension_semantics=("parallel",) * n_axes,
        vmem_limit_bytes=_VMEM_LIMIT)


# ---------------------------------------------------------------------------
# Kernel bodies
# ---------------------------------------------------------------------------
def _copy_kernel(x_ref, o_ref):
    # Lane/sublane-preserving permutation: pure DMA addressing, no relayout.
    o_ref[...] = x_ref[...]


def _relayout_kernel(x_ref, o_ref, *, local_perm):
    # Relayout one bounded VMEM tile: minor-dim reorder (XLU), then a possibly
    # flattening reshape so the store is lane-dense.
    t = jnp.transpose(x_ref[...], local_perm)
    o_ref[...] = t.reshape(o_ref.shape)


# ---------------------------------------------------------------------------
# Path 1: last two (sublane, lane) dims unchanged -> pure-copy DMA reorder.
# ---------------------------------------------------------------------------
def _permute_last_two_preserved(x, perm, cost):
    n = x.ndim
    shape = x.shape
    out_shape = tuple(shape[p] for p in perm)
    itemsize = jnp.dtype(x.dtype).itemsize
    align_s = _sublane_align(x.dtype)

    S, L = shape[n - 2], shape[n - 1]

    # Lane tile (only tiled for extremely wide rows) and sublane tile.
    tl = _aligned_tile(L, 128, max(128, _TILE_BUDGET // (align_s * itemsize)))
    ts = _aligned_tile(S, align_s, max(align_s, _TILE_BUDGET // (tl * itemsize)))

    # Merge several elements of the innermost leading *output* dim into the
    # block so small (S, L) faces still amortize per-grid-step overhead.
    merge_out = n - 3
    merge_in = perm[merge_out]                  # always a leading input dim
    face_bytes = ts * tl * itemsize
    k = max(1, min(out_shape[merge_out], _TILE_BUDGET // max(1, face_bytes)))

    n_lead = n - 2
    grid = tuple(out_shape[g] for g in range(n_lead - 1)) + (
        _cdiv(out_shape[merge_out], k), _cdiv(S, ts), _cdiv(L, tl))

    in_block = [None] * n
    in_block[merge_in] = k
    in_block[n - 2] = ts
    in_block[n - 1] = tl

    out_block = [None] * n
    out_block[merge_out] = k
    out_block[n - 2] = ts
    out_block[n - 1] = tl

    def in_index(*idx):
        lead, si, li = idx[:n_lead], idx[n_lead], idx[n_lead + 1]
        full = [0] * n
        for g in range(n_lead):
            full[perm[g]] = lead[g]
        full[n - 2] = si
        full[n - 1] = li
        return tuple(full)

    def out_index(*idx):
        lead, si, li = idx[:n_lead], idx[n_lead], idx[n_lead + 1]
        return tuple(lead) + (si, li)

    return pl.pallas_call(
        _copy_kernel,
        grid=grid,
        out_shape=jax.ShapeDtypeStruct(out_shape, x.dtype),
        in_specs=[pl.BlockSpec(tuple(in_block), in_index)],
        out_specs=pl.BlockSpec(tuple(out_block), out_index),
        compiler_params=_params(len(grid)),
        cost_estimate=cost,
    )(x)


# ---------------------------------------------------------------------------
# Path 2: batch-preserving permutations (perm[0] == 0, ndim >= 3).
# ---------------------------------------------------------------------------
def _permute_batch_preserving(x, perm, cost):
    n = x.ndim
    shape = x.shape
    out_shape = tuple(shape[p] for p in perm)
    B = shape[0]
    d1 = perm[1]                      # input dim that becomes output dim 1
    L1 = out_shape[1]

    itemsize = jnp.dtype(x.dtype).itemsize
    align_s = _sublane_align(x.dtype)
    align = 128 if d1 == n - 1 else align_s

    slab_bytes = math.prod(shape[1:]) * itemsize

    if slab_bytes <= _TILE_BUDGET:
        # Whole per-batch slab fits: pack multiple batch elements per step.
        t1 = L1
        b_tile = max(1, min(B, _TILE_BUDGET // slab_bytes))
    else:
        b_tile = 1
        per_unit = max(1, slab_bytes // L1)        # bytes per unit of dim 1
        t1 = _aligned_tile(L1, align, max(align, _TILE_BUDGET // per_unit))

    # Guarantee >= 2 grid steps so v7x's two TensorCores both get work.
    if _cdiv(B, b_tile) * _cdiv(L1, t1) == 1:
        if B >= 2:
            b_tile = _cdiv(B, 2)
        elif L1 >= 2 * align:
            half = _cdiv(_cdiv(L1, 2), align) * align
            if half < L1:
                t1 = half

    grid = (_cdiv(B, b_tile), _cdiv(L1, t1))
    squeeze_batch = (b_tile == 1)

    # ---- input: dim d1 tiled, all other non-batch dims full extent
    in_block = [None if squeeze_batch else b_tile] + [shape[d] for d in range(1, n)]
    in_block[d1] = t1

    def in_index(b, j):
        idx = [0] * n
        idx[0] = b
        idx[d1] = j
        return tuple(idx)

    # ---- output: lane-dense flattened slab when the true last dim is narrow
    #      or not lane-aligned (biggest single store-side lever).
    flatten = (n > 3) and (out_shape[-1] % 128 != 0)
    if flatten:
        F = math.prod(out_shape[2:])
        pallas_out_shape = (B, L1, F)
        out_block = [None if squeeze_batch else b_tile, t1, F]

        def out_index(b, j):
            return (b, j, 0)
    else:
        pallas_out_shape = out_shape
        out_block = [None if squeeze_batch else b_tile, t1] + list(out_shape[2:])

        def out_index(b, j):
            return (b, j) + (0,) * (n - 2)

    local_perm = tuple(p - 1 for p in perm[1:]) if squeeze_batch else perm

    out = pl.pallas_call(
        functools.partial(_relayout_kernel, local_perm=local_perm),
        grid=grid,
        out_shape=jax.ShapeDtypeStruct(pallas_out_shape, x.dtype),
        in_specs=[pl.BlockSpec(tuple(in_block), in_index)],
        out_specs=pl.BlockSpec(tuple(out_block), out_index),
        compiler_params=_params(2),
        cost_estimate=cost,
    )(x)
    if flatten:
        out = out.reshape(out_shape)   # free: matches the output's contiguity
    return out


# ---------------------------------------------------------------------------
# Path 3: permutations that move axis 0 -> gridded general path.
# ---------------------------------------------------------------------------
def _permute_gridded_general(x, perm, cost):
    n = x.ndim
    shape = x.shape
    out_shape = tuple(shape[p] for p in perm)
    itemsize = jnp.dtype(x.dtype).itemsize
    align_s = _sublane_align(x.dtype)

    g = None
    for cand in range(n - 2):
        if perm[cand] <= n - 3:
            g = cand
            break
    if g is None:
        return None
    d = perm[g]
    G = out_shape[g]

    block_bytes = (math.prod(shape) // shape[d]) * itemsize

    # VMEM feasibility: optionally tile a second axis (leading input source).
    h, th = None, None
    if block_bytes > _TILE_BUDGET:
        cands = [o for o in range(n) if o != g and perm[o] <= n - 3]
        if cands:
            h = max(cands, key=lambda o: out_shape[o])
            if h == n - 1:
                h_align = 128
            elif h == n - 2:
                h_align = align_s
            else:
                h_align = 1
            shrink = _cdiv(block_bytes, _TILE_BUDGET)
            th = _cdiv(out_shape[h], shrink)
            th = min(max(h_align, _cdiv(th, h_align) * h_align), out_shape[h])
            if th == out_shape[h]:
                h, th = None, None
    # TODO(synk): for huge tensors with exotic perms where a single extra tiled
    # axis is still not enough, tile further axes or stream via emit_pipeline.

    d2 = perm[h] if h is not None else None

    in_block = []
    for dd in range(n):
        if dd == d:
            in_block.append(None)
        elif d2 is not None and dd == d2:
            in_block.append(th)
        else:
            in_block.append(shape[dd])

    out_block = []
    for od in range(n):
        if od == g:
            out_block.append(None)
        elif h is not None and od == h:
            out_block.append(th)
        else:
            out_block.append(out_shape[od])

    if h is None:
        grid = (G,)

        def in_index(i):
            idx = [0] * n
            idx[d] = i
            return tuple(idx)

        def out_index(i):
            idx = [0] * n
            idx[g] = i
            return tuple(idx)
    else:
        grid = (G, _cdiv(out_shape[h], th))

        def in_index(i, j):
            idx = [0] * n
            idx[d] = i
            idx[d2] = j
            return tuple(idx)

        def out_index(i, j):
            idx = [0] * n
            idx[g] = i
            idx[h] = j
            return tuple(idx)

    rem_in = [dd for dd in range(n) if dd != d]
    axis_of = {dd: k for k, dd in enumerate(rem_in)}
    local_perm = tuple(axis_of[p] for p in perm if p != d)

    return pl.pallas_call(
        functools.partial(_relayout_kernel, local_perm=local_perm),
        grid=grid,
        out_shape=jax.ShapeDtypeStruct(out_shape, x.dtype),
        in_specs=[pl.BlockSpec(tuple(in_block), in_index)],
        out_specs=pl.BlockSpec(tuple(out_block), out_index),
        compiler_params=_params(len(grid)),
        cost_estimate=cost,
    )(x)


# ---------------------------------------------------------------------------
# Path 4: tiled 2-D transpose (perm == (1, 0)).
# ---------------------------------------------------------------------------
def _permute_2d_transpose(x, cost):
    M, N = x.shape
    itemsize = jnp.dtype(x.dtype).itemsize
    side = max(128, int(math.isqrt(max(1, _TILE_BUDGET // itemsize))))
    tm = _aligned_tile(M, 128, side)
    tn = _aligned_tile(N, 128, max(128, _TILE_BUDGET // max(1, tm * itemsize)))
    grid = (_cdiv(M, tm), _cdiv(N, tn))

    def kernel(x_ref, o_ref):
        o_ref[...] = x_ref[...].T

    return pl.pallas_call(
        kernel,
        grid=grid,
        out_shape=jax.ShapeDtypeStruct((N, M), x.dtype),
        in_specs=[pl.BlockSpec((tm, tn), lambda i, j: (i, j))],
        out_specs=pl.BlockSpec((tn, tm), lambda i, j: (j, i)),
        compiler_params=_params(2),
        cost_estimate=cost,
    )(x)


# ---------------------------------------------------------------------------
# Path 5: last-resort single-block fallback (small / exotic cases only).
# ---------------------------------------------------------------------------
def _permute_single_block(x, perm, cost):
    # TODO(synk): stream/tile this path for very large arrays with exotic
    # permutations (e.g. full reversals of all dims); it currently needs the
    # whole array to fit inside the scoped VMEM limit.
    n = x.ndim
    out_shape = tuple(x.shape[p] for p in perm)
    return pl.pallas_call(
        functools.partial(_relayout_kernel, local_perm=perm),
        out_shape=jax.ShapeDtypeStruct(out_shape, x.dtype),
        in_specs=[pl.BlockSpec(x.shape, lambda: (0,) * n)],
        out_specs=pl.BlockSpec(out_shape, lambda: (0,) * n),
        compiler_params=pltpu.CompilerParams(vmem_limit_bytes=_VMEM_LIMIT),
        cost_estimate=cost,
    )(x)


# ---------------------------------------------------------------------------
# Dispatch
# ---------------------------------------------------------------------------
def permute_pallas(x, new_view):
    """Pallas-TPU equivalent of torch `x.permute(*new_view)`."""
    n = x.ndim
    assert n == len(new_view)
    if n == 0:
        return x
    perm = tuple(int(p) % n for p in new_view)
    assert sorted(perm) == list(range(n)), "new_view must be a permutation"

    if perm == tuple(range(n)):
        return x                                   # identity permutation

    cost = _cost(x)

    # Pure-DMA fast path: the last two (sublane, lane) dims are unchanged.
    if n >= 3 and perm[-1] == n - 1 and perm[-2] == n - 2:
        return _permute_last_two_preserved(x, perm, cost)
    if n >= 3 and perm[0] == 0:
        return _permute_batch_preserving(x, perm, cost)
    if n == 2:
        return _permute_2d_transpose(x, cost)
    if n >= 3:
        out = _permute_gridded_general(x, perm, cost)
        if out is not None:
            return out
    return _permute_single_block(x, perm, cost)


class Permute:
    """Mirror of the PyTorch module: Permute(new_view)(x) == x.permute(*new_view)."""

    def __init__(self, new_view):
        self.new_view = tuple(new_view)

    def __call__(self, x):
        assert x.ndim == len(self.new_view)
        return permute_pallas(x, self.new_view)


if __name__ == "__main__":
    key = jax.random.PRNGKey(0)

    # NCHW input, small shapes consistent with the module's typical use.
    B, C, H, W = 2, 4, 16, 16
    x = jax.random.normal(key, (B, C, H, W), dtype=jnp.float32)

    # 1) Main path: NCHW -> NHWC (batch-preserving, lane-dense flattened output).
    new_view = (0, 2, 3, 1)
    mod = Permute(new_view)
    out = jax.block_until_ready(mod(x))
    ref = jnp.transpose(x, new_view)
    assert out.shape == ref.shape and out.dtype == ref.dtype
    assert jnp.array_equal(out, ref), "permute mismatch (batch-preserving path)"

    # 2) Lane-preserving fast path: swap leading dims, keep last two (pure copy).
    x2 = jax.random.normal(jax.random.PRNGKey(0), (2, 4, 8, 32), dtype=jnp.float32)
    out2 = jax.block_until_ready(permute_pallas(x2, (1, 0, 2, 3)))
    assert jnp.array_equal(out2, jnp.transpose(x2, (1, 0, 2, 3))), \
        "permute mismatch (lane-preserving fast path)"

    # 3) Permutation that moves the batch axis -> gridded general path.
    out3 = jax.block_until_ready(permute_pallas(x, (3, 1, 0, 2)))
    assert jnp.array_equal(out3, jnp.transpose(x, (3, 1, 0, 2))), \
        "permute mismatch (gridded general path)"

    # 4) 2-D transpose path.
    x4 = jax.random.normal(jax.random.PRNGKey(0), (16, 128), dtype=jnp.float32)
    out4 = jax.block_until_ready(permute_pallas(x4, (1, 0)))
    assert jnp.array_equal(out4, x4.T), "permute mismatch (2-D transpose path)"

    # 5) Exotic permutation hitting the single-block fallback.
    x5 = jax.random.normal(jax.random.PRNGKey(0), (4, 8, 128), dtype=jnp.float32)
    out5 = jax.block_until_ready(permute_pallas(x5, (2, 1, 0)))
    assert jnp.array_equal(out5, jnp.transpose(x5, (2, 1, 0))), \
        "permute mismatch (single-block fallback)"

    print("KERNEL_OK")
</pallas_src>

<mosaic_0001>
module attributes {stable_mosaic.version = 11 : i64} {
  func.func @_relayout_kernel(%arg0: i32, %arg1: i32, %arg2: memref<1x4x16x16xf32, #tpu.memory_space<vmem>>, %arg3: memref<1x16x64xf32, #tpu.memory_space<vmem>>) attributes {dimension_semantics = [#tpu.dimension_semantics<parallel>, #tpu.dimension_semantics<parallel>], iteration_bounds = array<i64: 2, 1>, scalar_prefetch = 0 : i64, scratch_operands = 0 : i64, tpu.core_type = #tpu.core_type<tc>, window_params = [{transform_indices = @transform_0, window_bounds = array<i64: 1, 4, 16, 16>}, {transform_indices = @transform_1, window_bounds = array<i64: 1, 16, 64>}]} {
    %c0 = arith.constant 0 : index
    %c0_0 = arith.constant 0 : index
    %c0_1 = arith.constant 0 : index
    %c0_2 = arith.constant 0 : index
    %0 = vector.load %arg2[%c0, %c0_0, %c0_1, %c0_2] : memref<1x4x16x16xf32, #tpu.memory_space<vmem>>, vector<1x4x16x16xf32>
    %1 = vector.shape_cast %0 : vector<1x4x16x16xf32> to vector<4x16x16xf32>
    %2 = tpu.transpose %1, [1, 2, 0] : vector<4x16x16xf32> -> vector<16x16x4xf32>
    %3 = vector.shape_cast %2 : vector<16x16x4xf32> to vector<16x64xf32>
    %c0_3 = arith.constant 0 : index
    %c0_4 = arith.constant 0 : index
    %c0_5 = arith.constant 0 : index
    %4 = vector.load %arg3[%c0_3, %c0_4, %c0_5] : memref<1x16x64xf32, #tpu.memory_space<vmem>>, vector<1x16x64xf32>
    %5 = vector.shape_cast %4 : vector<1x16x64xf32> to vector<16x64xf32>
    %6 = vector.shape_cast %3 : vector<16x64xf32> to vector<1x16x64xf32>
    tpu.vector_store %arg3[%c0_3, %c0_4, %c0_5], %6 {strides = array<i32>} : memref<1x16x64xf32, #tpu.memory_space<vmem>>, vector<1x16x64xf32>,
    return
  }
  func.func @transform_0(%arg0: i32, %arg1: i32) -> (i32, i32, i32, i32) {
    %c0_i32 = arith.constant 0 : i32
    %c0_i32_0 = arith.constant 0 : i32
    %c0_i32_1 = arith.constant 0 : i32
    return %arg0, %c0_i32, %arg1, %c0_i32_0 : i32, i32, i32, i32
  }
  func.func @transform_1(%arg0: i32, %arg1: i32) -> (i32, i32, i32) {
    %c0_i32 = arith.constant 0 : i32
    %c0_i32_0 = arith.constant 0 : i32
    return %arg0, %arg1, %c0_i32 : i32, i32, i32
  }
}

</mosaic_0001>

<llo_original>
// kernel: tpu_custom_call.1
$region0: #{tpu_custom_call.1}
  #allocation0 [shape = 'u32[]', space=smem, size = 0x4, offset = 0x4, fixed_abs, tag = 'smem constant byte address 0x4 - core index']
  #allocation1 [shape = 'u32[144,128]{1,0:T(1,128)}', space=vmem, size = 0x12000, scoped, tag = 'internal scratch']
  %s0 = inlined_call_operand.hbm [shape: f32[2,4,16,16], index: 0, kind: input, shape index: {}]
  %s1 = inlined_call_operand.hbm [shape: f32[2,16,64], index: 1, kind: output, shape index: {}]
  %s2 = sld [smem:[#allocation0]]
  $region41: #{tpu_custom_call.1} parent=0
    _
  %s4 = ssub.s32 1, %s2
  %s5 = scalar_select 0, %s4, %s2
  $region1: #{tpu_custom_call.1} parent=0
    #allocation2 [shape = 'u8[65536]{0}', space=vmem, size = 0x10000, scoped, tag = 'input window, operand 0']
    #allocation3 [shape = 's32[2]{0}', space=sflag, size = 0x8, scoped, tag = 'scoped memory for tpu_custom_call.1']
    #allocation4 [shape = 's32[2]{0}', space=sflag, size = 0x8, scoped, tag = 'scoped memory for tpu_custom_call.1']
    #allocation5 [shape = 'u8[16384]{0}', space=vmem, size = 0x4000, scoped, tag = 'output window, operand 0']
    %6 = vsyncpa [#allocation3], 0
    %s7 = scalar_lea.sflag [#allocation3], 1
    %8 = vsyncpa %s7, 0
    %9 = vsyncpa [#allocation4], 0
    %s10 = scalar_lea.sflag [#allocation4], 1
    %11 = vsyncpa %s10, 0
    loop: start=0, step=1, limit=4
    $region2: #{tpu_custom_call.1} parent=1 // loop_pre_header
      _
    $region3: #{tpu_custom_call.1} parent=1 // loop_header
      %s13 = sphi 0, %s17
      %p14 = scmp.ge.s32.totalorder %s13, 4
      %s20 = sphi 0, %s32
      %s21 = sphi 0, %s28
      %s22 = sphi 0, %s20
      %s23 = sphi 0, %s21
      %s24 = sphi 0, %s22
      %s25 = sphi 0, %s23
      %s37 = sphi 0, %s39
      %s40 = sphi 0, %s37
      %s41 = sphi 0, %s40
      %s57 = sphi 0, %s41
      %s65 = sphi 0, %s67
      %s68 = sphi 0, %s65
      %s69 = sphi 0, %s68
      %s85 = sphi 0, %s69
    $region4: #{tpu_custom_call.1} parent=1 // loop_header_branch
      %16 = sbr.rel (%p14) target = $region8
    $region5: #{tpu_custom_call.1} parent=1 // loop_body
      %s18 = ssub.s32 %s13, 1
      %s19 = ssub.s32 %s13, 2
      %s26 = sadd.s32 1, %s21
      %p27 = scmp.ge.s32.totalorder %s26, 1
      %s28 = scalar_select %p27, 0, %s26
      %s29 = sadd.s32 1, %s20
      %s30 = scalar_select %p27, %s29, %s20
      %p31 = scmp.ge.s32.totalorder %s30, 2
      %s32 = scalar_select %p31, 0, %s30
      %s33 = ssub.s32 %s20, %s32
      %s34 = ssub.s32 %s21, %s28
      %s35 = sor.u32 %s33, %s34
      %p36 = scmp.eq.s32.totalorder %s35, 0
      %s38 = sadd.s32 %s37, 1
      %s39 = scalar_select %p36, %s37, %s38
      %p42 = pneg %p36
      %p43 = scmp.eq.s32.totalorder %s13, 1
      %p44 = por %p42, %p43
      %p45 = scmp.ne.s32.totalorder %s37, %s40
      %p46 = scmp.eq.s32.totalorder %s13, 0
      %p47 = por %p45, %p46
      %p48 = scmp.ne.s32.totalorder %s37, %s40
      %p49 = scmp.eq.s32.totalorder %s18, 1
      %p50 = por %p48, %p49
      %p51 = scmp.ne.s32.totalorder %s40, %s41
      %p52 = scmp.eq.s32.totalorder %s18, 0
      %p53 = por %p51, %p52
      %p54 = scmp.ne.s32.totalorder %s40, %s41
      %p55 = scmp.eq.s32.totalorder %s19, 1
      %p56 = por %p54, %p55
      %p58 = scmp.ne.s32.totalorder %s41, %s57
      %p59 = scmp.eq.s32.totalorder %s19, 0
      %p60 = por %p58, %p59
      %s61 = ssub.s32 %s20, %s32
      %s62 = ssub.s32 %s21, %s28
      %s63 = sor.u32 %s61, %s62
      %p64 = scmp.eq.s32.totalorder %s63, 0
      %s66 = sadd.s32 %s65, 1
      %s67 = scalar_select %p64, %s65, %s66
      %p70 = pneg %p64
      %p71 = scmp.eq.s32.totalorder %s13, 1
      %p72 = por %p70, %p71
      %p73 = scmp.ne.s32.totalorder %s65, %s68
      %p74 = scmp.eq.s32.totalorder %s13, 0
      %p75 = por %p73, %p74
      %p76 = scmp.ne.s32.totalorder %s65, %s68
      %p77 = scmp.eq.s32.totalorder %s18, 1
      %p78 = por %p76, %p77
      %p79 = scmp.ne.s32.totalorder %s68, %s69
      %p80 = scmp.eq.s32.totalorder %s18, 0
      %p81 = por %p79, %p80
      %p82 = scmp.ne.s32.totalorder %s68, %s69
      %p83 = scmp.eq.s32.totalorder %s19, 1
      %p84 = por %p82, %p83
      %p86 = scmp.ne.s32.totalorder %s69, %s85
      %p87 = scmp.eq.s32.totalorder %s19, 0
      %p88 = por %p86, %p87
      %p89 = scmp.le.s32.totalorder 1, %s13
      %p90 = scmp.lt.s32.totalorder %s13, 3
      %p91 = pnand %p89, %p90
      %p92 = pneg %p91
      // Predicated region
      $region9: #{tpu_custom_call.1} parent=5 // pred_check
        _
      $region10: #{tpu_custom_call.1} parent=5 // pred_check_branch
        %94 = sbr.rel (%p91) target = $region12
      $region11: #{tpu_custom_call.1} parent=5 // pred_region
        %s95 = ssub.s32 %s13, 1
      $region12: #{tpu_custom_call.1} parent=5 // pred_fallthru
        _
      %p96 = scmp.lt.s32.totalorder %s13, 2
      // Predicated region
      $region13: #{tpu_custom_call.1} parent=5 // pred_check
        %p97 = pneg %p96
      $region14: #{tpu_custom_call.1} parent=5 // pred_check_branch
        %99 = sbr.rel (%p97) target = $region16
      $region15: #{tpu_custom_call.1} parent=5 // pred_region
        // Predicated region
        $region17: #{tpu_custom_call.1} parent=15 // pred_check
          %p100 = pneg %p47
        $region18: #{tpu_custom_call.1} parent=15 // pred_check_branch
          %102 = sbr.rel (%p100) target = $region20
        $region19: #{tpu_custom_call.1} parent=15 // pred_region
          %s103 = sand.u32 %s37, 1
          %s104 = scalar_lea.sflag [#allocation3], %s103
          %s105 = sand.u32 %s37, 1
          %s106 = smul.addr %s105, 64
          %s107 = scalar_lea.vmem [#allocation2], %s106
          %s108 = smul.u32 2, %s21
          %s110 = ssub.s32 1024, 1024
          %111 = vsyncadd %s104, %s110
          %s112 = smul.addr %s20, 8
          %s113 = sadd.s32 %s108, %s112
          %s114 = smul.addr %s113, 128
          %s115 = scalar_lea.hbm %s0, %s114
          %s116 = sshll.u32 %s107, 4
          %s117 = int_to_ptr.vmem [resolvable:$true] %s116
          %122 = dma.hbm_to_vmem [thread:$0]  %s115, 1024, %s117, %s104, 128, 128, 8
        $region20: #{tpu_custom_call.1} parent=15 // pred_fallthru
          _
      $region16: #{tpu_custom_call.1} parent=5 // pred_fallthru
        _
      %p123 = scmp.le.s32.totalorder 1, %s13
      %p124 = scmp.lt.s32.totalorder %s13, 3
      %p125 = pnand %p123, %p124
      %p126 = pneg %p125
      // Predicated region
      $region21: #{tpu_custom_call.1} parent=5 // pred_check
        _
      $region22: #{tpu_custom_call.1} parent=5 // pred_check_branch
        %128 = sbr.rel (%p125) target = $region24
      $region23: #{tpu_custom_call.1} parent=5 // pred_region
        %s129 = ssub.s32 %s13, 1
        %s130 = sand.u32 %s40, 1
        %s131 = scalar_lea.sflag [#allocation3], %s130
        %s132 = sand.u32 %s40, 1
        %s133 = smul.addr %s132, 64
        %s134 = scalar_lea.vmem [#allocation2], %s133
        // Predicated region
        $region25: #{tpu_custom_call.1} parent=23 // pred_check
          %p135 = pneg %p53
        $region26: #{tpu_custom_call.1} parent=23 // pred_check_branch
          %137 = sbr.rel (%p135) target = $region28
        $region27: #{tpu_custom_call.1} parent=23 // pred_region
          %138 = dma.done %s131, 1024
        $region28: #{tpu_custom_call.1} parent=23 // pred_fallthru
          _
        %s139 = sand.u32 %s40, 1
        %s140 = scalar_lea.sflag [#allocation3], %s139
        %s141 = sand.u32 %s40, 1
        %s142 = smul.addr %s141, 64
        %s143 = scalar_lea.vmem [#allocation2], %s142
        %p144 = pneg %p53
        %p145 = pneg %p50
        %p146 = pneg %p81
        %p147 = pneg %p78
        %s148 = sand.u32 %s68, 1
        %s149 = scalar_lea.sflag [#allocation4], %s148
        %s150 = sand.u32 %s68, 1
        %s151 = smul.addr %s150, 16
        %s152 = scalar_lea.vmem [#allocation5], %s151
        %s153 = smul.u32 2, %s23
        %s154 = smul.u32 2, %s23
        %v155 = vld [vmem:[%s134] sm:$0xff]
        %v156 = vld [vmem:[%s134 + $0x8] sm:$0xff]
        %v157 = vld [vmem:[%s134 + $0x10] sm:$0xff]
        %v158 = vld [vmem:[%s134 + $0x18] sm:$0xff]
        %v159 = vld [vmem:[%s134 + $0x20] sm:$0xff]
        %v160 = vld [vmem:[%s134 + $0x28] sm:$0xff]
        %v161 = vld [vmem:[%s134 + $0x30] sm:$0xff]
        %v162 = vld [vmem:[%s134 + $0x38] sm:$0xff]
        %163 = vxpose.xlu0.b32.start [1/16] %v155, 128
        %164 = vxpose.xlu0.b32.cont [2/16] %v156, 128
        %165 = vxpose.xlu0.b32.cont [3/16] 0.0, 128
        %166 = vxpose.xlu0.b32.cont [4/16] 0.0, 128
        %167 = vxpose.xlu0.b32.cont [5/16] 0.0, 128
        %168 = vxpose.xlu0.b32.cont [6/16] 0.0, 128
        %169 = vxpose.xlu0.b32.cont [7/16] 0.0, 128
        %170 = vxpose.xlu0.b32.cont [8/16] 0.0, 128
        %171 = vxpose.xlu0.b32.cont [9/16] 0.0, 128
        %172 = vxpose.xlu0.b32.cont [10/16] 0.0, 128
        %173 = vxpose.xlu0.b32.cont [11/16] 0.0, 128
        %174 = vxpose.xlu0.b32.cont [12/16] 0.0, 128
        %175 = vxpose.xlu0.b32.cont [13/16] 0.0, 128
        %176 = vxpose.xlu0.b32.cont [14/16] 0.0, 128
        %177 = vxpose.xlu0.b32.cont [15/16] 0.0, 128
        %178 = vxpose.xlu0.b32.end [16/16] 0.0, 128
        %v179 = vpop.trf.xlu0
        %v180 = vpop.trf.xlu0
        %v181 = vpop.trf.xlu0
        %v182 = vpop.trf.xlu0
        %v183 = vpop.trf.xlu0
        %v184 = vpop.trf.xlu0
        %v185 = vpop.trf.xlu0
        %v186 = vpop.trf.xlu0
        %v187 = vpop.trf.xlu0
        %v188 = vpop.trf.xlu0
        %v189 = vpop.trf.xlu0
        %v190 = vpop.trf.xlu0
        %v191 = vpop.trf.xlu0
        %v192 = vpop.trf.xlu0
        %v193 = vpop.trf.xlu0
        %v194 = vpop.trf.xlu0
        %195 = vxpose.xlu0.b32.start [1/16] %v157, 128
        %196 = vxpose.xlu0.b32.cont [2/16] %v158, 128
        %197 = vxpose.xlu0.b32.cont [3/16] 0.0, 128
        %198 = vxpose.xlu0.b32.cont [4/16] 0.0, 128
        %199 = vxpose.xlu0.b32.cont [5/16] 0.0, 128
        %200 = vxpose.xlu0.b32.cont [6/16] 0.0, 128
        %201 = vxpose.xlu0.b32.cont [7/16] 0.0, 128
        %202 = vxpose.xlu0.b32.cont [8/16] 0.0, 128
        %203 = vxpose.xlu0.b32.cont [9/16] 0.0, 128
        %204 = vxpose.xlu0.b32.cont [10/16] 0.0, 128
        %205 = vxpose.xlu0.b32.cont [11/16] 0.0, 128
        %206 = vxpose.xlu0.b32.cont [12/16] 0.0, 128
        %207 = vxpose.xlu0.b32.cont [13/16] 0.0, 128
        %208 = vxpose.xlu0.b32.cont [14/16] 0.0, 128
        %209 = vxpose.xlu0.b32.cont [15/16] 0.0, 128
        %210 = vxpose.xlu0.b32.end [16/16] 0.0, 128
        %v211 = vpop.trf.xlu0
        %v212 = vpop.trf.xlu0
        %v213 = vpop.trf.xlu0
        %v214 = vpop.trf.xlu0
        %v215 = vpop.trf.xlu0
        %v216 = vpop.trf.xlu0
        %v217 = vpop.trf.xlu0
        %v218 = vpop.trf.xlu0
        %v219 = vpop.trf.xlu0
        %v220 = vpop.trf.xlu0
        %v221 = vpop.trf.xlu0
        %v222 = vpop.trf.xlu0
        %v223 = vpop.trf.xlu0
        %v224 = vpop.trf.xlu0
        %v225 = vpop.trf.xlu0
        %v226 = vpop.trf.xlu0
        %227 = vxpose.xlu0.b32.start [1/16] %v159, 128
        %228 = vxpose.xlu0.b32.cont [2/16] %v160, 128
        %229 = vxpose.xlu0.b32.cont [3/16] 0.0, 128
        %230 = vxpose.xlu0.b32.cont [4/16] 0.0, 128
        %231 = vxpose.xlu0.b32.cont [5/16] 0.0, 128
        %232 = vxpose.xlu0.b32.cont [6/16] 0.0, 128
        %233 = vxpose.xlu0.b32.cont [7/16] 0.0, 128
        %234 = vxpose.xlu0.b32.cont [8/16] 0.0, 128
        %235 = vxpose.xlu0.b32.cont [9/16] 0.0, 128
        %236 = vxpose.xlu0.b32.cont [10/16] 0.0, 128
        %237 = vxpose.xlu0.b32.cont [11/16] 0.0, 128
        %238 = vxpose.xlu0.b32.cont [12/16] 0.0, 128
        %239 = vxpose.xlu0.b32.cont [13/16] 0.0, 128
        %240 = vxpose.xlu0.b32.cont [14/16] 0.0, 128
        %241 = vxpose.xlu0.b32.cont [15/16] 0.0, 128
        %242 = vxpose.xlu0.b32.end [16/16] 0.0, 128
        %v243 = vpop.trf.xlu0
        %v244 = vpop.trf.xlu0
        %v245 = vpop.trf.xlu0
        %v246 = vpop.trf.xlu0
        %v247 = vpop.trf.xlu0
        %v248 = vpop.trf.xlu0
        %v249 = vpop.trf.xlu0
        %v250 = vpop.trf.xlu0
        %v251 = vpop.trf.xlu0
        %v252 = vpop.trf.xlu0
        %v253 = vpop.trf.xlu0
        %v254 = vpop.trf.xlu0
        %v255 = vpop.trf.xlu0
        %v256 = vpop.trf.xlu0
        %v257 = vpop.trf.xlu0
        %v258 = vpop.trf.xlu0
        %259 = vxpose.xlu0.b32.start [1/16] %v161, 128
        %260 = vxpose.xlu0.b32.cont [2/16] %v162, 128
        %261 = vxpose.xlu0.b32.cont [3/16] 0.0, 128
        %262 = vxpose.xlu0.b32.cont [4/16] 0.0, 128
        %263 = vxpose.xlu0.b32.cont [5/16] 0.0, 128
        %264 = vxpose.xlu0.b32.cont [6/16] 0.0, 128
        %265 = vxpose.xlu0.b32.cont [7/16] 0.0, 128
        %266 = vxpose.xlu0.b32.cont [8/16] 0.0, 128
        %267 = vxpose.xlu0.b32.cont [9/16] 0.0, 128
        %268 = vxpose.xlu0.b32.cont [10/16] 0.0, 128
        %269 = vxpose.xlu0.b32.cont [11/16] 0.0, 128
        %270 = vxpose.xlu0.b32.cont [12/16] 0.0, 128
        %271 = vxpose.xlu0.b32.cont [13/16] 0.0, 128
        %272 = vxpose.xlu0.b32.cont [14/16] 0.0, 128
        %273 = vxpose.xlu0.b32.cont [15/16] 0.0, 128
        %274 = vxpose.xlu0.b32.end [16/16] 0.0, 128
        %v275 = vpop.trf.xlu0
        %v276 = vpop.trf.xlu0
        %v277 = vpop.trf.xlu0
        %v278 = vpop.trf.xlu0
        %v279 = vpop.trf.xlu0
        %v280 = vpop.trf.xlu0
        %v281 = vpop.trf.xlu0
        %v282 = vpop.trf.xlu0
        %v283 = vpop.trf.xlu0
        %v284 = vpop.trf.xlu0
        %v285 = vpop.trf.xlu0
        %v286 = vpop.trf.xlu0
        %v287 = vpop.trf.xlu0
        %v288 = vpop.trf.xlu0
        %v289 = vpop.trf.xlu0
        %v290 = vpop.trf.xlu0
        %v291 = vcombine.low %v179, %v243
        %v292 = vcombine.high %v179, %v243
        %v294 = vunpack.c.l.s4 1983009808
        %v295 = vunpack.c.0.s8 %v294
        %v296 = vlaneseq
        %v297 = vshrl.u32 %v296, 7
        %v298 = vsub.s32 %v295, %v297
        %v299 = vrot.slane %v291, %v298
        %v301 = vunpack.c.l.s4 1983009808
        %v302 = vunpack.c.0.s8 %v301
        %v303 = vlaneseq
        %v304 = vshrl.u32 %v303, 7
        %v305 = vsub.s32 %v302, %v304
        %v306 = vrot.slane %v292, %v305
        %v307 = vcombine.low %v211, %v275
        %v308 = vcombine.high %v211, %v275
        %v310 = vunpack.c.l.s4 1983009808
        %v311 = vunpack.c.0.s8 %v310
        %v312 = vlaneseq
        %v313 = vshrl.u32 %v312, 7
        %v314 = vsub.s32 %v311, %v313
        %v315 = vrot.slane %v307, %v314
        %v317 = vunpack.c.l.s4 1983009808
        %v318 = vunpack.c.0.s8 %v317
        %v319 = vlaneseq
        %v320 = vshrl.u32 %v319, 7
        %v321 = vsub.s32 %v318, %v320
        %v322 = vrot.slane %v308, %v321
        %v323 = vcombine.low %v299, %v315
        %v324 = vcombine.high %v299, %v315
        %v326 = vunpack.c.l.s4 1934713408
        %v327 = vunpack.c.0.s8 %v326
        %v328 = vlaneseq
        %v329 = vshrl.u32 %v328, 7
        %v330 = vsub.s32 %v327, %v329
        %v331 = vrot.slane %v323, %v330
        %v333 = vunpack.c.l.s4 1934713408
        %v334 = vunpack.c.0.s8 %v333
        %v335 = vlaneseq
        %v336 = vshrl.u32 %v335, 7
        %v337 = vsub.s32 %v334, %v336
        %v338 = vrot.slane %v324, %v337
        %v339 = vcombine.low %v306, %v322
        %v340 = vcombine.high %v306, %v322
        %v342 = vunpack.c.l.s4 1934713408
        %v343 = vunpack.c.0.s8 %v342
        %v344 = vlaneseq
        %v345 = vshrl.u32 %v344, 7
        %v346 = vsub.s32 %v343, %v345
        %v347 = vrot.slane %v339, %v346
        %v349 = vunpack.c.l.s4 1934713408
        %v350 = vunpack.c.0.s8 %v349
        %v351 = vlaneseq
        %v352 = vshrl.u32 %v351, 7
        %v353 = vsub.s32 %v350, %v352
        %v354 = vrot.slane %v340, %v353
        %v355 = vcombine.high %v331, 0.0
        %v356 = vcombine.high %v338, 0.0
        %v357 = vcombine.high %v347, 0.0
        %v358 = vcombine.high %v354, 0.0
        %v359 = vcombine.low %v180, %v244
        %v360 = vcombine.high %v180, %v244
        %v362 = vunpack.c.l.s4 1983009808
        %v363 = vunpack.c.0.s8 %v362
        %v364 = vlaneseq
        %v365 = vshrl.u32 %v364, 7
        %v366 = vsub.s32 %v363, %v365
        %v367 = vrot.slane %v359, %v366
        %v369 = vunpack.c.l.s4 1983009808
        %v370 = vunpack.c.0.s8 %v369
        %v371 = vlaneseq
        %v372 = vshrl.u32 %v371, 7
        %v373 = vsub.s32 %v370, %v372
        %v374 = vrot.slane %v360, %v373
        %v375 = vcombine.low %v212, %v276
        %v376 = vcombine.high %v212, %v276
        %v378 = vunpack.c.l.s4 1983009808
        %v379 = vunpack.c.0.s8 %v378
        %v380 = vlaneseq
        %v381 = vshrl.u32 %v380, 7
        %v382 = vsub.s32 %v379, %v381
        %v383 = vrot.slane %v375, %v382
        %v385 = vunpack.c.l.s4 1983009808
        %v386 = vunpack.c.0.s8 %v385
        %v387 = vlaneseq
        %v388 = vshrl.u32 %v387, 7
        %v389 = vsub.s32 %v386, %v388
        %v390 = vrot.slane %v376, %v389
        %v391 = vcombine.low %v367, %v383
        %v392 = vcombine.high %v367, %v383
        %v394 = vunpack.c.l.s4 1934713408
        %v395 = vunpack.c.0.s8 %v394
        %v396 = vlaneseq
        %v397 = vshrl.u32 %v396, 7
        %v398 = vsub.s32 %v395, %v397
        %v399 = vrot.slane %v391, %v398
        %v401 = vunpack.c.l.s4 1934713408
        %v402 = vunpack.c.0.s8 %v401
        %v403 = vlaneseq
        %v404 = vshrl.u32 %v403, 7
        %v405 = vsub.s32 %v402, %v404
        %v406 = vrot.slane %v392, %v405
        %v407 = vcombine.low %v374, %v390
        %v408 = vcombine.high %v374, %v390
        %v410 = vunpack.c.l.s4 1934713408
        %v411 = vunpack.c.0.s8 %v410
        %v412 = vlaneseq
        %v413 = vshrl.u32 %v412, 7
        %v414 = vsub.s32 %v411, %v413
        %v415 = vrot.slane %v407, %v414
        %v417 = vunpack.c.l.s4 1934713408
        %v418 = vunpack.c.0.s8 %v417
        %v419 = vlaneseq
        %v420 = vshrl.u32 %v419, 7
        %v421 = vsub.s32 %v418, %v420
        %v422 = vrot.slane %v408, %v421
        %v423 = vcombine.high %v399, 0.0
        %v424 = vcombine.high %v406, 0.0
        %v425 = vcombine.high %v415, 0.0
        %v426 = vcombine.high %v422, 0.0
        %427 = vxpose.xlu0.b32.start [1/16] %v331, 128
        %428 = vxpose.xlu0.b32.cont [2/16] 0.0, 128
        %429 = vxpose.xlu0.b32.cont [3/16] 0.0, 128
        %430 = vxpose.xlu0.b32.cont [4/16] 0.0, 128
        %431 = vxpose.xlu0.b32.cont [5/16] 0.0, 128
        %432 = vxpose.xlu0.b32.cont [6/16] 0.0, 128
        %433 = vxpose.xlu0.b32.cont [7/16] 0.0, 128
        %434 = vxpose.xlu0.b32.cont [8/16] 0.0, 128
        %435 = vxpose.xlu0.b32.cont [9/16] 0.0, 128
        %436 = vxpose.xlu0.b32.cont [10/16] 0.0, 128
        %437 = vxpose.xlu0.b32.cont [11/16] 0.0, 128
        %438 = vxpose.xlu0.b32.cont [12/16] 0.0, 128
        %439 = vxpose.xlu0.b32.cont [13/16] 0.0, 128
        %440 = vxpose.xlu0.b32.cont [14/16] 0.0, 128
        %441 = vxpose.xlu0.b32.cont [15/16] 0.0, 128
        %442 = vxpose.xlu0.b32.end [16/16] 0.0, 128
        %v443 = vpop.trf.xlu0
        %v444 = vpop.trf.xlu0
        %v445 = vpop.trf.xlu0
        %v446 = vpop.trf.xlu0
        %v447 = vpop.trf.xlu0
        %v448 = vpop.trf.xlu0
        %v449 = vpop.trf.xlu0
        %v450 = vpop.trf.xlu0
        %v451 = vpop.trf.xlu0
        %v452 = vpop.trf.xlu0
        %v453 = vpop.trf.xlu0
        %v454 = vpop.trf.xlu0
        %v455 = vpop.trf.xlu0
        %v456 = vpop.trf.xlu0
        %v457 = vpop.trf.xlu0
        %v458 = vpop.trf.xlu0
        %459 = vxpose.xlu0.b32.start [1/16] %v355, 128
        %460 = vxpose.xlu0.b32.cont [2/16] 0.0, 128
        %461 = vxpose.xlu0.b32.cont [3/16] 0.0, 128
        %462 = vxpose.xlu0.b32.cont [4/16] 0.0, 128
        %463 = vxpose.xlu0.b32.cont [5/16] 0.0, 128
        %464 = vxpose.xlu0.b32.cont [6/16] 0.0, 128
        %465 = vxpose.xlu0.b32.cont [7/16] 0.0, 128
        %466 = vxpose.xlu0.b32.cont [8/16] 0.0, 128
        %467 = vxpose.xlu0.b32.cont [9/16] 0.0, 128
        %468 = vxpose.xlu0.b32.cont [10/16] 0.0, 128
        %469 = vxpose.xlu0.b32.cont [11/16] 0.0, 128
        %470 = vxpose.xlu0.b32.cont [12/16] 0.0, 128
        %471 = vxpose.xlu0.b32.cont [13/16] 0.0, 128
        %472 = vxpose.xlu0.b32.cont [14/16] 0.0, 128
        %473 = vxpose.xlu0.b32.cont [15/16] 0.0, 128
        %474 = vxpose.xlu0.b32.end [16/16] 0.0, 128
        %v475 = vpop.trf.xlu0
        %v476 = vpop.trf.xlu0
        %v477 = vpop.trf.xlu0
        %v478 = vpop.trf.xlu0
        %v479 = vpop.trf.xlu0
        %v480 = vpop.trf.xlu0
        %v481 = vpop.trf.xlu0
        %v482 = vpop.trf.xlu0
        %v483 = vpop.trf.xlu0
        %v484 = vpop.trf.xlu0
        %v485 = vpop.trf.xlu0
        %v486 = vpop.trf.xlu0
        %v487 = vpop.trf.xlu0
        %v488 = vpop.trf.xlu0
        %v489 = vpop.trf.xlu0
        %v490 = vpop.trf.xlu0
        %491 = vxpose.xlu0.b32.start [1/16] %v338, 128
        %492 = vxpose.xlu0.b32.cont [2/16] 0.0, 128
        %493 = vxpose.xlu0.b32.cont [3/16] 0.0, 128
        %494 = vxpose.xlu0.b32.cont [4/16] 0.0, 128
        %495 = vxpose.xlu0.b32.cont [5/16] 0.0, 128
        %496 = vxpose.xlu0.b32.cont [6/16] 0.0, 128
        %497 = vxpose.xlu0.b32.cont [7/16] 0.0, 128
        %498 = vxpose.xlu0.b32.cont [8/16] 0.0, 128
        %499 = vxpose.xlu0.b32.cont [9/16] 0.0, 128
        %500 = vxpose.xlu0.b32.cont [10/16] 0.0, 128
        %501 = vxpose.xlu0.b32.cont [11/16] 0.0, 128
        %502 = vxpose.xlu0.b32.cont [12/16] 0.0, 128
        %503 = vxpose.xlu0.b32.cont [13/16] 0.0, 128
        %504 = vxpose.xlu0.b32.cont [14/16] 0.0, 128
        %505 = vxpose.xlu0.b32.cont [15/16] 0.0, 128
        %506 = vxpose.xlu0.b32.end [16/16] 0.0, 128
        %v507 = vpop.trf.xlu0
        %v508 = vpop.trf.xlu0
        %v509 = vpop.trf.xlu0
        %v510 = vpop.trf.xlu0
        %v511 = vpop.trf.xlu0
        %v512 = vpop.trf.xlu0
        %v513 = vpop.trf.xlu0
        %v514 = vpop.trf.xlu0
        %v515 = vpop.trf.xlu0
        %v516 = vpop.trf.xlu0
        %v517 = vpop.trf.xlu0
        %v518 = vpop.trf.xlu0
        %v519 = vpop.trf.xlu0
        %v520 = vpop.trf.xlu0
        %v521 = vpop.trf.xlu0
        %v522 = vpop.trf.xlu0
        %523 = vxpose.xlu0.b32.start [1/16] %v356, 128
        %524 = vxpose.xlu0.b32.cont [2/16] 0.0, 128
        %525 = vxpose.xlu0.b32.cont [3/16] 0.0, 128
        %526 = vxpose.xlu0.b32.cont [4/16] 0.0, 128
        %527 = vxpose.xlu0.b32.cont [5/16] 0.0, 128
        %528 = vxpose.xlu0.b32.cont [6/16] 0.0, 128
        %529 = vxpose.xlu0.b32.cont [7/16] 0.0, 128
        %530 = vxpose.xlu0.b32.cont [8/16] 0.0, 128
        %531 = vxpose.xlu0.b32.cont [9/16] 0.0, 128
        %532 = vxpose.xlu0.b32.cont [10/16] 0.0, 128
        %533 = vxpose.xlu0.b32.cont [11/16] 0.0, 128
        %534 = vxpose.xlu0.b32.cont [12/16] 0.0, 128
        %535 = vxpose.xlu0.b32.cont [13/16] 0.0, 128
        %536 = vxpose.xlu0.b32.cont [14/16] 0.0, 128
        %537 = vxpose.xlu0.b32.cont [15/16] 0.0, 128
        %538 = vxpose.xlu0.b32.end [16/16] 0.0, 128
        %v539 = vpop.trf.xlu0
        %v540 = vpop.trf.xlu0
        %v541 = vpop.trf.xlu0
        %v542 = vpop.trf.xlu0
        %v543 = vpop.trf.xlu0
        %v544 = vpop.trf.xlu0
        %v545 = vpop.trf.xlu0
        %v546 = vpop.trf.xlu0
        %v547 = vpop.trf.xlu0
        %v548 = vpop.trf.xlu0
        %v549 = vpop.trf.xlu0
        %v550 = vpop.trf.xlu0
        %v551 = vpop.trf.xlu0
        %v552 = vpop.trf.xlu0
        %v553 = vpop.trf.xlu0
        %v554 = vpop.trf.xlu0
        %555 = vxpose.xlu0.b32.start [1/16] %v347, 128
        %556 = vxpose.xlu0.b32.cont [2/16] 0.0, 128
        %557 = vxpose.xlu0.b32.cont [3/16] 0.0, 128
        %558 = vxpose.xlu0.b32.cont [4/16] 0.0, 128
        %559 = vxpose.xlu0.b32.cont [5/16] 0.0, 128
        %560 = vxpose.xlu0.b32.cont [6/16] 0.0, 128
        %561 = vxpose.xlu0.b32.cont [7/16] 0.0, 128
        %562 = vxpose.xlu0.b32.cont [8/16] 0.0, 128
        %563 = vxpose.xlu0.b32.cont [9/16] 0.0, 128
        %564 = vxpose.xlu0.b32.cont [10/16] 0.0, 128
        %565 = vxpose.xlu0.b32.cont [11/16] 0.0, 128
        %566 = vxpose.xlu0.b32.cont [12/16] 0.0, 128
        %567 = vxpose.xlu0.b32.cont [13/16] 0.0, 128
        %568 = vxpose.xlu0.b32.cont [14/16] 0.0, 128
        %569 = vxpose.xlu0.b32.cont [15/16] 0.0, 128
        %570 = vxpose.xlu0.b32.end [16/16] 0.0, 128
        %v571 = vpop.trf.xlu0
        %v572 = vpop.trf.xlu0
        %v573 = vpop.trf.xlu0
        %v574 = vpop.trf.xlu0
        %v575 = vpop.trf.xlu0
        %v576 = vpop.trf.xlu0
        %v577 = vpop.trf.xlu0
        %v578 = vpop.trf.xlu0
        %v579 = vpop.trf.xlu0
        %v580 = vpop.trf.xlu0
        %v581 = vpop.trf.xlu0
        %v582 = vpop.trf.xlu0
        %v583 = vpop.trf.xlu0
        %v584 = vpop.trf.xlu0
        %v585 = vpop.trf.xlu0
        %v586 = vpop.trf.xlu0
        %587 = vxpose.xlu0.b32.start [1/16] %v357, 128
        %588 = vxpose.xlu0.b32.cont [2/16] 0.0, 128
        %589 = vxpose.xlu0.b32.cont [3/16] 0.0, 128
        %590 = vxpose.xlu0.b32.cont [4/16] 0.0, 128
        %591 = vxpose.xlu0.b32.cont [5/16] 0.0, 128
        %592 = vxpose.xlu0.b32.cont [6/16] 0.0, 128
        %593 = vxpose.xlu0.b32.cont [7/16] 0.0, 128
        %594 = vxpose.xlu0.b32.cont [8/16] 0.0, 128
        %595 = vxpose.xlu0.b32.cont [9/16] 0.0, 128
        %596 = vxpose.xlu0.b32.cont [10/16] 0.0, 128
        %597 = vxpose.xlu0.b32.cont [11/16] 0.0, 128
        %598 = vxpose.xlu0.b32.cont [12/16] 0.0, 128
        %599 = vxpose.xlu0.b32.cont [13/16] 0.0, 128
        %600 = vxpose.xlu0.b32.cont [14/16] 0.0, 128
        %601 = vxpose.xlu0.b32.cont [15/16] 0.0, 128
        %602 = vxpose.xlu0.b32.end [16/16] 0.0, 128
        %v603 = vpop.trf.xlu0
        %v604 = vpop.trf.xlu0
        %v605 = vpop.trf.xlu0
        %v606 = vpop.trf.xlu0
        %v607 = vpop.trf.xlu0
        %v608 = vpop.trf.xlu0
        %v609 = vpop.trf.xlu0
        %v610 = vpop.trf.xlu0
        %v611 = vpop.trf.xlu0
        %v612 = vpop.trf.xlu0
        %v613 = vpop.trf.xlu0
        %v614 = vpop.trf.xlu0
        %v615 = vpop.trf.xlu0
        %v616 = vpop.trf.xlu0
        %v617 = vpop.trf.xlu0
        %v618 = vpop.trf.xlu0
        %619 = vxpose.xlu0.b32.start [1/16] %v354, 128
        %620 = vxpose.xlu0.b32.cont [2/16] 0.0, 128
        %621 = vxpose.xlu0.b32.cont [3/16] 0.0, 128
        %622 = vxpose.xlu0.b32.cont [4/16] 0.0, 128
        %623 = vxpose.xlu0.b32.cont [5/16] 0.0, 128
        %624 = vxpose.xlu0.b32.cont [6/16] 0.0, 128
        %625 = vxpose.xlu0.b32.cont [7/16] 0.0, 128
        %626 = vxpose.xlu0.b32.cont [8/16] 0.0, 128
        %627 = vxpose.xlu0.b32.cont [9/16] 0.0, 128
        %628 = vxpose.xlu0.b32.cont [10/16] 0.0, 128
        %629 = vxpose.xlu0.b32.cont [11/16] 0.0, 128
        %630 = vxpose.xlu0.b32.cont [12/16] 0.0, 128
        %631 = vxpose.xlu0.b32.cont [13/16] 0.0, 128
        %632 = vxpose.xlu0.b32.cont [14/16] 0.0, 128
        %633 = vxpose.xlu0.b32.cont [15/16] 0.0, 128
        %634 = vxpose.xlu0.b32.end [16/16] 0.0, 128
        %v635 = vpop.trf.xlu0
        %v636 = vpop.trf.xlu0
        %v637 = vpop.trf.xlu0
        %v638 = vpop.trf.xlu0
        %v639 = vpop.trf.xlu0
        %v640 = vpop.trf.xlu0
        %v641 = vpop.trf.xlu0
        %v642 = vpop.trf.xlu0
        %v643 = vpop.trf.xlu0
        %v644 = vpop.trf.xlu0
        %v645 = vpop.trf.xlu0
        %v646 = vpop.trf.xlu0
        %v647 = vpop.trf.xlu0
        %v648 = vpop.trf.xlu0
        %v649 = vpop.trf.xlu0
        %v650 = vpop.trf.xlu0
        %651 = vxpose.xlu0.b32.start [1/16] %v358, 128
        %652 = vxpose.xlu0.b32.cont [2/16] 0.0, 128
        %653 = vxpose.xlu0.b32.cont [3/16] 0.0, 128
        %654 = vxpose.xlu0.b32.cont [4/16] 0.0, 128
        %655 = vxpose.xlu0.b32.cont [5/16] 0.0, 128
        %656 = vxpose.xlu0.b32.cont [6/16] 0.0, 128
        %657 = vxpose.xlu0.b32.cont [7/16] 0.0, 128
        %658 = vxpose.xlu0.b32.cont [8/16] 0.0, 128
        %659 = vxpose.xlu0.b32.cont [9/16] 0.0, 128
        %660 = vxpose.xlu0.b32.cont [10/16] 0.0, 128
        %661 = vxpose.xlu0.b32.cont [11/16] 0.0, 128
        %662 = vxpose.xlu0.b32.cont [12/16] 0.0, 128
        %663 = vxpose.xlu0.b32.cont [13/16] 0.0, 128
        %664 = vxpose.xlu0.b32.cont [14/16] 0.0, 128
        %665 = vxpose.xlu0.b32.cont [15/16] 0.0, 128
        %666 = vxpose.xlu0.b32.end [16/16] 0.0, 128
        %v667 = vpop.trf.xlu0
        %v668 = vpop.trf.xlu0
        %v669 = vpop.trf.xlu0
        %v670 = vpop.trf.xlu0
        %v671 = vpop.trf.xlu0
        %v672 = vpop.trf.xlu0
        %v673 = vpop.trf.xlu0
        %v674 = vpop.trf.xlu0
        %v675 = vpop.trf.xlu0
        %v676 = vpop.trf.xlu0
        %v677 = vpop.trf.xlu0
        %v678 = vpop.trf.xlu0
        %v679 = vpop.trf.xlu0
        %v680 = vpop.trf.xlu0
        %v681 = vpop.trf.xlu0
        %v682 = vpop.trf.xlu0
        %683 = vxpose.xlu0.b32.start [1/16] %v399, 128
        %684 = vxpose.xlu0.b32.cont [2/16] 0.0, 128
        %685 = vxpose.xlu0.b32.cont [3/16] 0.0, 128
        %686 = vxpose.xlu0.b32.cont [4/16] 0.0, 128
        %687 = vxpose.xlu0.b32.cont [5/16] 0.0, 128
        %688 = vxpose.xlu0.b32.cont [6/16] 0.0, 128
        %689 = vxpose.xlu0.b32.cont [7/16] 0.0, 128
        %690 = vxpose.xlu0.b32.cont [8/16] 0.0, 128
        %691 = vxpose.xlu0.b32.cont [9/16] 0.0, 128
        %692 = vxpose.xlu0.b32.cont [10/16] 0.0, 128
        %693 = vxpose.xlu0.b32.cont [11/16] 0.0, 128
        %694 = vxpose.xlu0.b32.cont [12/16] 0.0, 128
        %695 = vxpose.xlu0.b32.cont [13/16] 0.0, 128
        %696 = vxpose.xlu0.b32.cont [14/16] 0.0, 128
        %697 = vxpose.xlu0.b32.cont [15/16] 0.0, 128
        %698 = vxpose.xlu0.b32.end [16/16] 0.0, 128
        %v699 = vpop.trf.xlu0
        %v700 = vpop.trf.xlu0
        %v701 = vpop.trf.xlu0
        %v702 = vpop.trf.xlu0
        %v703 = vpop.trf.xlu0
        %v704 = vpop.trf.xlu0
        %v705 = vpop.trf.xlu0
        %v706 = vpop.trf.xlu0
        %v707 = vpop.trf.xlu0
        %v708 = vpop.trf.xlu0
        %v709 = vpop.trf.xlu0
        %v710 = vpop.trf.xlu0
        %v711 = vpop.trf.xlu0
        %v712 = vpop.trf.xlu0
        %v713 = vpop.trf.xlu0
        %v714 = vpop.trf.xlu0
        %715 = vxpose.xlu0.b32.start [1/16] %v423, 128
        %716 = vxpose.xlu0.b32.cont [2/16] 0.0, 128
        %717 = vxpose.xlu0.b32.cont [3/16] 0.0, 128
        %718 = vxpose.xlu0.b32.cont [4/16] 0.0, 128
        %719 = vxpose.xlu0.b32.cont [5/16] 0.0, 128
        %720 = vxpose.xlu0.b32.cont [6/16] 0.0, 128
        %721 = vxpose.xlu0.b32.cont [7/16] 0.0, 128
        %722 = vxpose.xlu0.b32.cont [8/16] 0.0, 128
        %723 = vxpose.xlu0.b32.cont [9/16] 0.0, 128
        %724 = vxpose.xlu0.b32.cont [10/16] 0.0, 128
        %725 = vxpose.xlu0.b32.cont [11/16] 0.0, 128
        %726 = vxpose.xlu0.b32.cont [12/16] 0.0, 128
        %727 = vxpose.xlu0.b32.cont [13/16] 0.0, 128
        %728 = vxpose.xlu0.b32.cont [14/16] 0.0, 128
        %729 = vxpose.xlu0.b32.cont [15/16] 0.0, 128
        %730 = vxpose.xlu0.b32.end [16/16] 0.0, 128
        %v731 = vpop.trf.xlu0
        %v732 = vpop.trf.xlu0
        %v733 = vpop.trf.xlu0
        %v734 = vpop.trf.xlu0
        %v735 = vpop.trf.xlu0
        %v736 = vpop.trf.xlu0
        %v737 = vpop.trf.xlu0
        %v738 = vpop.trf.xlu0
        %v739 = vpop.trf.xlu0
        %v740 = vpop.trf.xlu0
        %v741 = vpop.trf.xlu0
        %v742 = vpop.trf.xlu0
        %v743 = vpop.trf.xlu0
        %v744 = vpop.trf.xlu0
        %v745 = vpop.trf.xlu0
        %v746 = vpop.trf.xlu0
        %747 = vxpose.xlu0.b32.start [1/16] %v406, 128
        %748 = vxpose.xlu0.b32.cont [2/16] 0.0, 128
        %749 = vxpose.xlu0.b32.cont [3/16] 0.0, 128
        %750 = vxpose.xlu0.b32.cont [4/16] 0.0, 128
        %751 = vxpose.xlu0.b32.cont [5/16] 0.0, 128
        %752 = vxpose.xlu0.b32.cont [6/16] 0.0, 128
        %753 = vxpose.xlu0.b32.cont [7/16] 0.0, 128
        %754 = vxpose.xlu0.b32.cont [8/16] 0.0, 128
        %755 = vxpose.xlu0.b32.cont [9/16] 0.0, 128
        %756 = vxpose.xlu0.b32.cont [10/16] 0.0, 128
        %757 = vxpose.xlu0.b32.cont [11/16] 0.0, 128
        %758 = vxpose.xlu0.b32.cont [12/16] 0.0, 128
        %759 = vxpose.xlu0.b32.cont [13/16] 0.0, 128
        %760 = vxpose.xlu0.b32.cont [14/16] 0.0, 128
        %761 = vxpose.xlu0.b32.cont [15/16] 0.0, 128
        %762 = vxpose.xlu0.b32.end [16/16] 0.0, 128
        %v763 = vpop.trf.xlu0
        %v764 = vpop.trf.xlu0
        %v765 = vpop.trf.xlu0
        %v766 = vpop.trf.xlu0
        %v767 = vpop.trf.xlu0
        %v768 = vpop.trf.xlu0
        %v769 = vpop.trf.xlu0
        %v770 = vpop.trf.xlu0
        %v771 = vpop.trf.xlu0
        %v772 = vpop.trf.xlu0
        %v773 = vpop.trf.xlu0
        %v774 = vpop.trf.xlu0
        %v775 = vpop.trf.xlu0
        %v776 = vpop.trf.xlu0
        %v777 = vpop.trf.xlu0
        %v778 = vpop.trf.xlu0
        %779 = vxpose.xlu0.b32.start [1/16] %v424, 128
        %780 = vxpose.xlu0.b32.cont [2/16] 0.0, 128
        %781 = vxpose.xlu0.b32.cont [3/16] 0.0, 128
        %782 = vxpose.xlu0.b32.cont [4/16] 0.0, 128
        %783 = vxpose.xlu0.b32.cont [5/16] 0.0, 128
        %784 = vxpose.xlu0.b32.cont [6/16] 0.0, 128
        %785 = vxpose.xlu0.b32.cont [7/16] 0.0, 128
        %786 = vxpose.xlu0.b32.cont [8/16] 0.0, 128
        %787 = vxpose.xlu0.b32.cont [9/16] 0.0, 128
        %788 = vxpose.xlu0.b32.cont [10/16] 0.0, 128
        %789 = vxpose.xlu0.b32.cont [11/16] 0.0, 128
        %790 = vxpose.xlu0.b32.cont [12/16] 0.0, 128
        %791 = vxpose.xlu0.b32.cont [13/16] 0.0, 128
        %792 = vxpose.xlu0.b32.cont [14/16] 0.0, 128
        %793 = vxpose.xlu0.b32.cont [15/16] 0.0, 128
        %794 = vxpose.xlu0.b32.end [16/16] 0.0, 128
        %v795 = vpop.trf.xlu0
        %v796 = vpop.trf.xlu0
        %v797 = vpop.trf.xlu0
        %v798 = vpop.trf.xlu0
        %v799 = vpop.trf.xlu0
        %v800 = vpop.trf.xlu0
        %v801 = vpop.trf.xlu0
        %v802 = vpop.trf.xlu0
        %v803 = vpop.trf.xlu0
        %v804 = vpop.trf.xlu0
        %v805 = vpop.trf.xlu0
        %v806 = vpop.trf.xlu0
        %v807 = vpop.trf.xlu0
        %v808 = vpop.trf.xlu0
        %v809 = vpop.trf.xlu0
        %v810 = vpop.trf.xlu0
        %811 = vxpose.xlu0.b32.start [1/16] %v415, 128
        %812 = vxpose.xlu0.b32.cont [2/16] 0.0, 128
        %813 = vxpose.xlu0.b32.cont [3/16] 0.0, 128
        %814 = vxpose.xlu0.b32.cont [4/16] 0.0, 128
        %815 = vxpose.xlu0.b32.cont [5/16] 0.0, 128
        %816 = vxpose.xlu0.b32.cont [6/16] 0.0, 128
        %817 = vxpose.xlu0.b32.cont [7/16] 0.0, 128
        %818 = vxpose.xlu0.b32.cont [8/16] 0.0, 128
        %819 = vxpose.xlu0.b32.cont [9/16] 0.0, 128
        %820 = vxpose.xlu0.b32.cont [10/16] 0.0, 128
        %821 = vxpose.xlu0.b32.cont [11/16] 0.0, 128
        %822 = vxpose.xlu0.b32.cont [12/16] 0.0, 128
        %823 = vxpose.xlu0.b32.cont [13/16] 0.0, 128
        %824 = vxpose.xlu0.b32.cont [14/16] 0.0, 128
        %825 = vxpose.xlu0.b32.cont [15/16] 0.0, 128
        %826 = vxpose.xlu0.b32.end [16/16] 0.0, 128
        %v827 = vpop.trf.xlu0
        %v828 = vpop.trf.xlu0
        %v829 = vpop.trf.xlu0
        %v830 = vpop.trf.xlu0
        %v831 = vpop.trf.xlu0
        %v832 = vpop.trf.xlu0
        %v833 = vpop.trf.xlu0
        %v834 = vpop.trf.xlu0
        %v835 = vpop.trf.xlu0
        %v836 = vpop.trf.xlu0
        %v837 = vpop.trf.xlu0
        %v838 = vpop.trf.xlu0
        %v839 = vpop.trf.xlu0
        %v840 = vpop.trf.xlu0
        %v841 = vpop.trf.xlu0
        %v842 = vpop.trf.xlu0
        %843 = vxpose.xlu0.b32.start [1/16] %v425, 128
        %844 = vxpose.xlu0.b32.cont [2/16] 0.0, 128
        %845 = vxpose.xlu0.b32.cont [3/16] 0.0, 128
        %846 = vxpose.xlu0.b32.cont [4/16] 0.0, 128
        %847 = vxpose.xlu0.b32.cont [5/16] 0.0, 128
        %848 = vxpose.xlu0.b32.cont [6/16] 0.0, 128
        %849 = vxpose.xlu0.b32.cont [7/16] 0.0, 128
        %850 = vxpose.xlu0.b32.cont [8/16] 0.0, 128
        %851 = vxpose.xlu0.b32.cont [9/16] 0.0, 128
        %852 = vxpose.xlu0.b32.cont [10/16] 0.0, 128
        %853 = vxpose.xlu0.b32.cont [11/16] 0.0, 128
        %854 = vxpose.xlu0.b32.cont [12/16] 0.0, 128
        %855 = vxpose.xlu0.b32.cont [13/16] 0.0, 128
        %856 = vxpose.xlu0.b32.cont [14/16] 0.0, 128
        %857 = vxpose.xlu0.b32.cont [15/16] 0.0, 128
        %858 = vxpose.xlu0.b32.end [16/16] 0.0, 128
        %v859 = vpop.trf.xlu0
        %v860 = vpop.trf.xlu0
        %v861 = vpop.trf.xlu0
        %v862 = vpop.trf.xlu0
        %v863 = vpop.trf.xlu0
        %v864 = vpop.trf.xlu0
        %v865 = vpop.trf.xlu0
        %v866 = vpop.trf.xlu0
        %v867 = vpop.trf.xlu0
        %v868 = vpop.trf.xlu0
        %v869 = vpop.trf.xlu0
        %v870 = vpop.trf.xlu0
        %v871 = vpop.trf.xlu0
        %v872 = vpop.trf.xlu0
        %v873 = vpop.trf.xlu0
        %v874 = vpop.trf.xlu0
        %875 = vxpose.xlu0.b32.start [1/16] %v422, 128
        %876 = vxpose.xlu0.b32.cont [2/16] 0.0, 128
        %877 = vxpose.xlu0.b32.cont [3/16] 0.0, 128
        %878 = vxpose.xlu0.b32.cont [4/16] 0.0, 128
        %879 = vxpose.xlu0.b32.cont [5/16] 0.0, 128
        %880 = vxpose.xlu0.b32.cont [6/16] 0.0, 128
        %881 = vxpose.xlu0.b32.cont [7/16] 0.0, 128
        %882 = vxpose.xlu0.b32.cont [8/16] 0.0, 128
        %883 = vxpose.xlu0.b32.cont [9/16] 0.0, 128
        %884 = vxpose.xlu0.b32.cont [10/16] 0.0, 128
        %885 = vxpose.xlu0.b32.cont [11/16] 0.0, 128
        %886 = vxpose.xlu0.b32.cont [12/16] 0.0, 128
        %887 = vxpose.xlu0.b32.cont [13/16] 0.0, 128
        %888 = vxpose.xlu0.b32.cont [14/16] 0.0, 128
        %889 = vxpose.xlu0.b32.cont [15/16] 0.0, 128
        %890 = vxpose.xlu0.b32.end [16/16] 0.0, 128
        %v891 = vpop.trf.xlu0
        %v892 = vpop.trf.xlu0
        %v893 = vpop.trf.xlu0
        %v894 = vpop.trf.xlu0
        %v895 = vpop.trf.xlu0
        %v896 = vpop.trf.xlu0
        %v897 = vpop.trf.xlu0
        %v898 = vpop.trf.xlu0
        %v899 = vpop.trf.xlu0
        %v900 = vpop.trf.xlu0
        %v901 = vpop.trf.xlu0
        %v902 = vpop.trf.xlu0
        %v903 = vpop.trf.xlu0
        %v904 = vpop.trf.xlu0
        %v905 = vpop.trf.xlu0
        %v906 = vpop.trf.xlu0
        %907 = vxpose.xlu0.b32.start [1/16] %v426, 128
        %908 = vxpose.xlu0.b32.cont [2/16] 0.0, 128
        %909 = vxpose.xlu0.b32.cont [3/16] 0.0, 128
        %910 = vxpose.xlu0.b32.cont [4/16] 0.0, 128
        %911 = vxpose.xlu0.b32.cont [5/16] 0.0, 128
        %912 = vxpose.xlu0.b32.cont [6/16] 0.0, 128
        %913 = vxpose.xlu0.b32.cont [7/16] 0.0, 128
        %914 = vxpose.xlu0.b32.cont [8/16] 0.0, 128
        %915 = vxpose.xlu0.b32.cont [9/16] 0.0, 128
        %916 = vxpose.xlu0.b32.cont [10/16] 0.0, 128
        %917 = vxpose.xlu0.b32.cont [11/16] 0.0, 128
        %918 = vxpose.xlu0.b32.cont [12/16] 0.0, 128
        %919 = vxpose.xlu0.b32.cont [13/16] 0.0, 128
        %920 = vxpose.xlu0.b32.cont [14/16] 0.0, 128
        %921 = vxpose.xlu0.b32.cont [15/16] 0.0, 128
        %922 = vxpose.xlu0.b32.end [16/16] 0.0, 128
        %v923 = vpop.trf.xlu0
        %v924 = vpop.trf.xlu0
        %v925 = vpop.trf.xlu0
        %v926 = vpop.trf.xlu0
        %v927 = vpop.trf.xlu0
        %v928 = vpop.trf.xlu0
        %v929 = vpop.trf.xlu0
        %v930 = vpop.trf.xlu0
        %v931 = vpop.trf.xlu0
        %v932 = vpop.trf.xlu0
        %v933 = vpop.trf.xlu0
        %v934 = vpop.trf.xlu0
        %v935 = vpop.trf.xlu0
        %v936 = vpop.trf.xlu0
        %v937 = vpop.trf.xlu0
        %v938 = vpop.trf.xlu0
        %v939 = vcombine.low %v443, %v507
        %v940 = vcombine.high %v443, %v507
        %v942 = vunpack.c.l.s4 1983009808
        %v943 = vunpack.c.0.s8 %v942
        %v944 = vlaneseq
        %v945 = vshrl.u32 %v944, 7
        %v946 = vsub.s32 %v943, %v945
        %v947 = vrot.slane %v939, %v946
        %v949 = vunpack.c.l.s4 1983009808
        %v950 = vunpack.c.0.s8 %v949
        %v951 = vlaneseq
        %v952 = vshrl.u32 %v951, 7
        %v953 = vsub.s32 %v950, %v952
        %v954 = vrot.slane %v940, %v953
        %v955 = vcombine.low %v475, %v539
        %v956 = vcombine.high %v475, %v539
        %v958 = vunpack.c.l.s4 1983009808
        %v959 = vunpack.c.0.s8 %v958
        %v960 = vlaneseq
        %v961 = vshrl.u32 %v960, 7
        %v962 = vsub.s32 %v959, %v961
        %v963 = vrot.slane %v955, %v962
        %v965 = vunpack.c.l.s4 1983009808
        %v966 = vunpack.c.0.s8 %v965
        %v967 = vlaneseq
        %v968 = vshrl.u32 %v967, 7
        %v969 = vsub.s32 %v966, %v968
        %v970 = vrot.slane %v956, %v969
        %v971 = vcombine.low %v571, %v635
        %v972 = vcombine.high %v571, %v635
        %v974 = vunpack.c.l.s4 1983009808
        %v975 = vunpack.c.0.s8 %v974
        %v976 = vlaneseq
        %v977 = vshrl.u32 %v976, 7
        %v978 = vsub.s32 %v975, %v977
        %v979 = vrot.slane %v971, %v978
        %v981 = vunpack.c.l.s4 1983009808
        %v982 = vunpack.c.0.s8 %v981
        %v983 = vlaneseq
        %v984 = vshrl.u32 %v983, 7
        %v985 = vsub.s32 %v982, %v984
        %v986 = vrot.slane %v972, %v985
        %v987 = vcombine.low %v603, %v667
        %v988 = vcombine.high %v603, %v667
        %v990 = vunpack.c.l.s4 1983009808
        %v991 = vunpack.c.0.s8 %v990
        %v992 = vlaneseq
        %v993 = vshrl.u32 %v992, 7
        %v994 = vsub.s32 %v991, %v993
        %v995 = vrot.slane %v987, %v994
        %v997 = vunpack.c.l.s4 1983009808
        %v998 = vunpack.c.0.s8 %v997
        %v999 = vlaneseq
        %v1000 = vshrl.u32 %v999, 7
        %v1001 = vsub.s32 %v998, %v1000
        %v1002 = vrot.slane %v988, %v1001
        %v1003 = vcombine.low %v947, %v963
        %v1004 = vcombine.high %v947, %v963
        %v1006 = vunpack.c.l.s4 1934713408
        %v1007 = vunpack.c.0.s8 %v1006
        %v1008 = vlaneseq
        %v1009 = vshrl.u32 %v1008, 7
        %v1010 = vsub.s32 %v1007, %v1009
        %v1011 = vrot.slane %v1003, %v1010
        %v1013 = vunpack.c.l.s4 1934713408
        %v1014 = vunpack.c.0.s8 %v1013
        %v1015 = vlaneseq
        %v1016 = vshrl.u32 %v1015, 7
        %v1017 = vsub.s32 %v1014, %v1016
        %v1018 = vrot.slane %v1004, %v1017
        %v1019 = vcombine.low %v954, %v970
        %v1020 = vcombine.high %v954, %v970
        %v1022 = vunpack.c.l.s4 1934713408
        %v1023 = vunpack.c.0.s8 %v1022
        %v1024 = vlaneseq
        %v1025 = vshrl.u32 %v1024, 7
        %v1026 = vsub.s32 %v1023, %v1025
        %v1027 = vrot.slane %v1019, %v1026
        %v1029 = vunpack.c.l.s4 1934713408
        %v1030 = vunpack.c.0.s8 %v1029
        %v1031 = vlaneseq
        %v1032 = vshrl.u32 %v1031, 7
        %v1033 = vsub.s32 %v1030, %v1032
        %v1034 = vrot.slane %v1020, %v1033
        %v1035 = vcombine.low %v979, %v995
        %v1036 = vcombine.high %v979, %v995
        %v1038 = vunpack.c.l.s4 1934713408
        %v1039 = vunpack.c.0.s8 %v1038
        %v1040 = vlaneseq
        %v1041 = vshrl.u32 %v1040, 7
        %v1042 = vsub.s32 %v1039, %v1041
        %v1043 = vrot.slane %v1035, %v1042
        %v1045 = vunpack.c.l.s4 1934713408
        %v1046 = vunpack.c.0.s8 %v1045
        %v1047 = vlaneseq
        %v1048 = vshrl.u32 %v1047, 7
        %v1049 = vsub.s32 %v1046, %v1048
        %v1050 = vrot.slane %v1036, %v1049
        %v1051 = vcombine.low %v986, %v1002
        %v1052 = vcombine.high %v986, %v1002
        %v1054 = vunpack.c.l.s4 1934713408
        %v1055 = vunpack.c.0.s8 %v1054
        %v1056 = vlaneseq
        %v1057 = vshrl.u32 %v1056, 7
        %v1058 = vsub.s32 %v1055, %v1057
        %v1059 = vrot.slane %v1051, %v1058
        %v1061 = vunpack.c.l.s4 1934713408
        %v1062 = vunpack.c.0.s8 %v1061
        %v1063 = vlaneseq
        %v1064 = vshrl.u32 %v1063, 7
        %v1065 = vsub.s32 %v1062, %v1064
        %v1066 = vrot.slane %v1052, %v1065
        %v1067 = vcombine.low %v1011, %v1043
        %v1068 = vcombine.high %v1011, %v1043
        %v1069 = vcombine.low %v1018, %v1050
        %v1070 = vcombine.high %v1018, %v1050
        %v1071 = vcombine.low %v1027, %v1059
        %v1072 = vcombine.high %v1027, %v1059
        %v1073 = vcombine.low %v1034, %v1066
        %v1074 = vcombine.high %v1034, %v1066
        %v1075 = vcombine.low %v699, %v763
        %v1076 = vcombine.high %v699, %v763
        %v1078 = vunpack.c.l.s4 1983009808
        %v1079 = vunpack.c.0.s8 %v1078
        %v1080 = vlaneseq
        %v1081 = vshrl.u32 %v1080, 7
        %v1082 = vsub.s32 %v1079, %v1081
        %v1083 = vrot.slane %v1075, %v1082
        %v1085 = vunpack.c.l.s4 1983009808
        %v1086 = vunpack.c.0.s8 %v1085
        %v1087 = vlaneseq
        %v1088 = vshrl.u32 %v1087, 7
        %v1089 = vsub.s32 %v1086, %v1088
        %v1090 = vrot.slane %v1076, %v1089
        %v1091 = vcombine.low %v731, %v795
        %v1092 = vcombine.high %v731, %v795
        %v1094 = vunpack.c.l.s4 1983009808
        %v1095 = vunpack.c.0.s8 %v1094
        %v1096 = vlaneseq
        %v1097 = vshrl.u32 %v1096, 7
        %v1098 = vsub.s32 %v1095, %v1097
        %v1099 = vrot.slane %v1091, %v1098
        %v1101 = vunpack.c.l.s4 1983009808
        %v1102 = vunpack.c.0.s8 %v1101
        %v1103 = vlaneseq
        %v1104 = vshrl.u32 %v1103, 7
        %v1105 = vsub.s32 %v1102, %v1104
        %v1106 = vrot.slane %v1092, %v1105
        %v1107 = vcombine.low %v827, %v891
        %v1108 = vcombine.high %v827, %v891
        %v1110 = vunpack.c.l.s4 1983009808
        %v1111 = vunpack.c.0.s8 %v1110
        %v1112 = vlaneseq
        %v1113 = vshrl.u32 %v1112, 7
        %v1114 = vsub.s32 %v1111, %v1113
        %v1115 = vrot.slane %v1107, %v1114
        %v1117 = vunpack.c.l.s4 1983009808
        %v1118 = vunpack.c.0.s8 %v1117
        %v1119 = vlaneseq
        %v1120 = vshrl.u32 %v1119, 7
        %v1121 = vsub.s32 %v1118, %v1120
        %v1122 = vrot.slane %v1108, %v1121
        %v1123 = vcombine.low %v859, %v923
        %v1124 = vcombine.high %v859, %v923
        %v1126 = vunpack.c.l.s4 1983009808
        %v1127 = vunpack.c.0.s8 %v1126
        %v1128 = vlaneseq
        %v1129 = vshrl.u32 %v1128, 7
        %v1130 = vsub.s32 %v1127, %v1129
        %v1131 = vrot.slane %v1123, %v1130
        %v1133 = vunpack.c.l.s4 1983009808
        %v1134 = vunpack.c.0.s8 %v1133
        %v1135 = vlaneseq
        %v1136 = vshrl.u32 %v1135, 7
        %v1137 = vsub.s32 %v1134, %v1136
        %v1138 = vrot.slane %v1124, %v1137
        %v1139 = vcombine.low %v1083, %v1099
        %v1140 = vcombine.high %v1083, %v1099
        %v1142 = vunpack.c.l.s4 1934713408
        %v1143 = vunpack.c.0.s8 %v1142
        %v1144 = vlaneseq
        %v1145 = vshrl.u32 %v1144, 7
        %v1146 = vsub.s32 %v1143, %v1145
        %v1147 = vrot.slane %v1139, %v1146
        %v1149 = vunpack.c.l.s4 1934713408
        %v1150 = vunpack.c.0.s8 %v1149
        %v1151 = vlaneseq
        %v1152 = vshrl.u32 %v1151, 7
        %v1153 = vsub.s32 %v1150, %v1152
        %v1154 = vrot.slane %v1140, %v1153
        %v1155 = vcombine.low %v1090, %v1106
        %v1156 = vcombine.high %v1090, %v1106
        %v1158 = vunpack.c.l.s4 1934713408
        %v1159 = vunpack.c.0.s8 %v1158
        %v1160 = vlaneseq
        %v1161 = vshrl.u32 %v1160, 7
        %v1162 = vsub.s32 %v1159, %v1161
        %v1163 = vrot.slane %v1155, %v1162
        %v1165 = vunpack.c.l.s4 1934713408
        %v1166 = vunpack.c.0.s8 %v1165
        %v1167 = vlaneseq
        %v1168 = vshrl.u32 %v1167, 7
        %v1169 = vsub.s32 %v1166, %v1168
        %v1170 = vrot.slane %v1156, %v1169
        %v1171 = vcombine.low %v1115, %v1131
        %v1172 = vcombine.high %v1115, %v1131
        %v1174 = vunpack.c.l.s4 1934713408
        %v1175 = vunpack.c.0.s8 %v1174
        %v1176 = vlaneseq
        %v1177 = vshrl.u32 %v1176, 7
        %v1178 = vsub.s32 %v1175, %v1177
        %v1179 = vrot.slane %v1171, %v1178
        %v1181 = vunpack.c.l.s4 1934713408
        %v1182 = vunpack.c.0.s8 %v1181
        %v1183 = vlaneseq
        %v1184 = vshrl.u32 %v1183, 7
        %v1185 = vsub.s32 %v1182, %v1184
        %v1186 = vrot.slane %v1172, %v1185
        %v1187 = vcombine.low %v1122, %v1138
        %v1188 = vcombine.high %v1122, %v1138
        %v1190 = vunpack.c.l.s4 1934713408
        %v1191 = vunpack.c.0.s8 %v1190
        %v1192 = vlaneseq
        %v1193 = vshrl.u32 %v1192, 7
        %v1194 = vsub.s32 %v1191, %v1193
        %v1195 = vrot.slane %v1187, %v1194
        %v1197 = vunpack.c.l.s4 1934713408
        %v1198 = vunpack.c.0.s8 %v1197
        %v1199 = vlaneseq
        %v1200 = vshrl.u32 %v1199, 7
        %v1201 = vsub.s32 %v1198, %v1200
        %v1202 = vrot.slane %v1188, %v1201
        %v1203 = vcombine.low %v1147, %v1179
        %v1204 = vcombine.high %v1147, %v1179
        %v1205 = vcombine.low %v1154, %v1186
        %v1206 = vcombine.high %v1154, %v1186
        %v1207 = vcombine.low %v1163, %v1195
        %v1208 = vcombine.high %v1163, %v1195
        %v1209 = vcombine.low %v1170, %v1202
        %v1210 = vcombine.high %v1170, %v1202
        %v1211 = vcombine.low %v444, %v508
        %v1212 = vcombine.high %v444, %v508
        %v1214 = vunpack.c.l.s4 1983009808
        %v1215 = vunpack.c.0.s8 %v1214
        %v1216 = vlaneseq
        %v1217 = vshrl.u32 %v1216, 7
        %v1218 = vsub.s32 %v1215, %v1217
        %v1219 = vrot.slane %v1211, %v1218
        %v1221 = vunpack.c.l.s4 1983009808
        %v1222 = vunpack.c.0.s8 %v1221
        %v1223 = vlaneseq
        %v1224 = vshrl.u32 %v1223, 7
        %v1225 = vsub.s32 %v1222, %v1224
        %v1226 = vrot.slane %v1212, %v1225
        %v1227 = vcombine.low %v476, %v540
        %v1228 = vcombine.high %v476, %v540
        %v1230 = vunpack.c.l.s4 1983009808
        %v1231 = vunpack.c.0.s8 %v1230
        %v1232 = vlaneseq
        %v1233 = vshrl.u32 %v1232, 7
        %v1234 = vsub.s32 %v1231, %v1233
        %v1235 = vrot.slane %v1227, %v1234
        %v1237 = vunpack.c.l.s4 1983009808
        %v1238 = vunpack.c.0.s8 %v1237
        %v1239 = vlaneseq
        %v1240 = vshrl.u32 %v1239, 7
        %v1241 = vsub.s32 %v1238, %v1240
        %v1242 = vrot.slane %v1228, %v1241
        %v1243 = vcombine.low %v572, %v636
        %v1244 = vcombine.high %v572, %v636
        %v1246 = vunpack.c.l.s4 1983009808
        %v1247 = vunpack.c.0.s8 %v1246
        %v1248 = vlaneseq
        %v1249 = vshrl.u32 %v1248, 7
        %v1250 = vsub.s32 %v1247, %v1249
        %v1251 = vrot.slane %v1243, %v1250
        %v1253 = vunpack.c.l.s4 1983009808
        %v1254 = vunpack.c.0.s8 %v1253
        %v1255 = vlaneseq
        %v1256 = vshrl.u32 %v1255, 7
        %v1257 = vsub.s32 %v1254, %v1256
        %v1258 = vrot.slane %v1244, %v1257
        %v1259 = vcombine.low %v604, %v668
        %v1260 = vcombine.high %v604, %v668
        %v1262 = vunpack.c.l.s4 1983009808
        %v1263 = vunpack.c.0.s8 %v1262
        %v1264 = vlaneseq
        %v1265 = vshrl.u32 %v1264, 7
        %v1266 = vsub.s32 %v1263, %v1265
        %v1267 = vrot.slane %v1259, %v1266
        %v1269 = vunpack.c.l.s4 1983009808
        %v1270 = vunpack.c.0.s8 %v1269
        %v1271 = vlaneseq
        %v1272 = vshrl.u32 %v1271, 7
        %v1273 = vsub.s32 %v1270, %v1272
        %v1274 = vrot.slane %v1260, %v1273
        %v1275 = vcombine.low %v1219, %v1235
        %v1276 = vcombine.high %v1219, %v1235
        %v1278 = vunpack.c.l.s4 1934713408
        %v1279 = vunpack.c.0.s8 %v1278
        %v1280 = vlaneseq
        %v1281 = vshrl.u32 %v1280, 7
        %v1282 = vsub.s32 %v1279, %v1281
        %v1283 = vrot.slane %v1275, %v1282
        %v1285 = vunpack.c.l.s4 1934713408
        %v1286 = vunpack.c.0.s8 %v1285
        %v1287 = vlaneseq
        %v1288 = vshrl.u32 %v1287, 7
        %v1289 = vsub.s32 %v1286, %v1288
        %v1290 = vrot.slane %v1276, %v1289
        %v1291 = vcombine.low %v1226, %v1242
        %v1292 = vcombine.high %v1226, %v1242
        %v1294 = vunpack.c.l.s4 1934713408
        %v1295 = vunpack.c.0.s8 %v1294
        %v1296 = vlaneseq
        %v1297 = vshrl.u32 %v1296, 7
        %v1298 = vsub.s32 %v1295, %v1297
        %v1299 = vrot.slane %v1291, %v1298
        %v1301 = vunpack.c.l.s4 1934713408
        %v1302 = vunpack.c.0.s8 %v1301
        %v1303 = vlaneseq
        %v1304 = vshrl.u32 %v1303, 7
        %v1305 = vsub.s32 %v1302, %v1304
        %v1306 = vrot.slane %v1292, %v1305
        %v1307 = vcombine.low %v1251, %v1267
        %v1308 = vcombine.high %v1251, %v1267
        %v1310 = vunpack.c.l.s4 1934713408
        %v1311 = vunpack.c.0.s8 %v1310
        %v1312 = vlaneseq
        %v1313 = vshrl.u32 %v1312, 7
        %v1314 = vsub.s32 %v1311, %v1313
        %v1315 = vrot.slane %v1307, %v1314
        %v1317 = vunpack.c.l.s4 1934713408
        %v1318 = vunpack.c.0.s8 %v1317
        %v1319 = vlaneseq
        %v1320 = vshrl.u32 %v1319, 7
        %v1321 = vsub.s32 %v1318, %v1320
        %v1322 = vrot.slane %v1308, %v1321
        %v1323 = vcombine.low %v1258, %v1274
        %v1324 = vcombine.high %v1258, %v1274
        %v1326 = vunpack.c.l.s4 1934713408
        %v1327 = vunpack.c.0.s8 %v1326
        %v1328 = vlaneseq
        %v1329 = vshrl.u32 %v1328, 7
        %v1330 = vsub.s32 %v1327, %v1329
        %v1331 = vrot.slane %v1323, %v1330
        %v1333 = vunpack.c.l.s4 1934713408
        %v1334 = vunpack.c.0.s8 %v1333
        %v1335 = vlaneseq
        %v1336 = vshrl.u32 %v1335, 7
        %v1337 = vsub.s32 %v1334, %v1336
        %v1338 = vrot.slane %v1324, %v1337
        %v1339 = vcombine.low %v1283, %v1315
        %v1340 = vcombine.high %v1283, %v1315
        %v1341 = vcombine.low %v1290, %v1322
        %v1342 = vcombine.high %v1290, %v1322
        %v1343 = vcombine.low %v1299, %v1331
        %v1344 = vcombine.high %v1299, %v1331
        %v1345 = vcombine.low %v1306, %v1338
        %v1346 = vcombine.high %v1306, %v1338
        %v1347 = vcombine.low %v700, %v764
        %v1348 = vcombine.high %v700, %v764
        %v1350 = vunpack.c.l.s4 1983009808
        %v1351 = vunpack.c.0.s8 %v1350
        %v1352 = vlaneseq
        %v1353 = vshrl.u32 %v1352, 7
        %v1354 = vsub.s32 %v1351, %v1353
        %v1355 = vrot.slane %v1347, %v1354
        %v1357 = vunpack.c.l.s4 1983009808
        %v1358 = vunpack.c.0.s8 %v1357
        %v1359 = vlaneseq
        %v1360 = vshrl.u32 %v1359, 7
        %v1361 = vsub.s32 %v1358, %v1360
        %v1362 = vrot.slane %v1348, %v1361
        %v1363 = vcombine.low %v732, %v796
        %v1364 = vcombine.high %v732, %v796
        %v1366 = vunpack.c.l.s4 1983009808
        %v1367 = vunpack.c.0.s8 %v1366
        %v1368 = vlaneseq
        %v1369 = vshrl.u32 %v1368, 7
        %v1370 = vsub.s32 %v1367, %v1369
        %v1371 = vrot.slane %v1363, %v1370
        %v1373 = vunpack.c.l.s4 1983009808
        %v1374 = vunpack.c.0.s8 %v1373
        %v1375 = vlaneseq
        %v1376 = vshrl.u32 %v1375, 7
        %v1377 = vsub.s32 %v1374, %v1376
        %v1378 = vrot.slane %v1364, %v1377
        %v1379 = vcombine.low %v828, %v892
        %v1380 = vcombine.high %v828, %v892
        %v1382 = vunpack.c.l.s4 1983009808
        %v1383 = vunpack.c.0.s8 %v1382
        %v1384 = vlaneseq
        %v1385 = vshrl.u32 %v1384, 7
        %v1386 = vsub.s32 %v1383, %v1385
        %v1387 = vrot.slane %v1379, %v1386
        %v1389 = vunpack.c.l.s4 1983009808
        %v1390 = vunpack.c.0.s8 %v1389
        %v1391 = vlaneseq
        %v1392 = vshrl.u32 %v1391, 7
        %v1393 = vsub.s32 %v1390, %v1392
        %v1394 = vrot.slane %v1380, %v1393
        %v1395 = vcombine.low %v860, %v924
        %v1396 = vcombine.high %v860, %v924
        %v1398 = vunpack.c.l.s4 1983009808
        %v1399 = vunpack.c.0.s8 %v1398
        %v1400 = vlaneseq
        %v1401 = vshrl.u32 %v1400, 7
        %v1402 = vsub.s32 %v1399, %v1401
        %v1403 = vrot.slane %v1395, %v1402
        %v1405 = vunpack.c.l.s4 1983009808
        %v1406 = vunpack.c.0.s8 %v1405
        %v1407 = vlaneseq
        %v1408 = vshrl.u32 %v1407, 7
        %v1409 = vsub.s32 %v1406, %v1408
        %v1410 = vrot.slane %v1396, %v1409
        %v1411 = vcombine.low %v1355, %v1371
        %v1412 = vcombine.high %v1355, %v1371
        %v1414 = vunpack.c.l.s4 1934713408
        %v1415 = vunpack.c.0.s8 %v1414
        %v1416 = vlaneseq
        %v1417 = vshrl.u32 %v1416, 7
        %v1418 = vsub.s32 %v1415, %v1417
        %v1419 = vrot.slane %v1411, %v1418
        %v1421 = vunpack.c.l.s4 1934713408
        %v1422 = vunpack.c.0.s8 %v1421
        %v1423 = vlaneseq
        %v1424 = vshrl.u32 %v1423, 7
        %v1425 = vsub.s32 %v1422, %v1424
        %v1426 = vrot.slane %v1412, %v1425
        %v1427 = vcombine.low %v1362, %v1378
        %v1428 = vcombine.high %v1362, %v1378
        %v1430 = vunpack.c.l.s4 1934713408
        %v1431 = vunpack.c.0.s8 %v1430
        %v1432 = vlaneseq
        %v1433 = vshrl.u32 %v1432, 7
        %v1434 = vsub.s32 %v1431, %v1433
        %v1435 = vrot.slane %v1427, %v1434
        %v1437 = vunpack.c.l.s4 1934713408
        %v1438 = vunpack.c.0.s8 %v1437
        %v1439 = vlaneseq
        %v1440 = vshrl.u32 %v1439, 7
        %v1441 = vsub.s32 %v1438, %v1440
        %v1442 = vrot.slane %v1428, %v1441
        %v1443 = vcombine.low %v1387, %v1403
        %v1444 = vcombine.high %v1387, %v1403
        %v1446 = vunpack.c.l.s4 1934713408
        %v1447 = vunpack.c.0.s8 %v1446
        %v1448 = vlaneseq
        %v1449 = vshrl.u32 %v1448, 7
        %v1450 = vsub.s32 %v1447, %v1449
        %v1451 = vrot.slane %v1443, %v1450
        %v1453 = vunpack.c.l.s4 1934713408
        %v1454 = vunpack.c.0.s8 %v1453
        %v1455 = vlaneseq
        %v1456 = vshrl.u32 %v1455, 7
        %v1457 = vsub.s32 %v1454, %v1456
        %v1458 = vrot.slane %v1444, %v1457
        %v1459 = vcombine.low %v1394, %v1410
        %v1460 = vcombine.high %v1394, %v1410
        %v1462 = vunpack.c.l.s4 1934713408
        %v1463 = vunpack.c.0.s8 %v1462
        %v1464 = vlaneseq
        %v1465 = vshrl.u32 %v1464, 7
        %v1466 = vsub.s32 %v1463, %v1465
        %v1467 = vrot.slane %v1459, %v1466
        %v1469 = vunpack.c.l.s4 1934713408
        %v1470 = vunpack.c.0.s8 %v1469
        %v1471 = vlaneseq
        %v1472 = vshrl.u32 %v1471, 7
        %v1473 = vsub.s32 %v1470, %v1472
        %v1474 = vrot.slane %v1460, %v1473
        %v1475 = vcombine.low %v1419, %v1451
        %v1476 = vcombine.high %v1419, %v1451
        %v1477 = vcombine.low %v1426, %v1458
        %v1478 = vcombine.high %v1426, %v1458
        %v1479 = vcombine.low %v1435, %v1467
        %v1480 = vcombine.high %v1435, %v1467
        %v1481 = vcombine.low %v1442, %v1474
        %v1482 = vcombine.high %v1442, %v1474
        %v1483 = vcombine.low %v1067, %v1069
        %v1484 = vcombine.high %v1067, %v1069
        %v1486 = vunpack.c.l.s4 1983009808
        %v1487 = vunpack.c.0.s8 %v1486
        %v1488 = vlaneseq
        %v1489 = vshrl.u32 %v1488, 7
        %v1490 = vsub.s32 %v1487, %v1489
        %v1491 = vrot.slane %v1483, %v1490
        %v1493 = vunpack.c.l.s4 1983009808
        %v1494 = vunpack.c.0.s8 %v1493
        %v1495 = vlaneseq
        %v1496 = vshrl.u32 %v1495, 7
        %v1497 = vsub.s32 %v1494, %v1496
        %v1498 = vrot.slane %v1484, %v1497
        %v1499 = vcombine.low %v1068, %v1070
        %v1500 = vcombine.high %v1068, %v1070
        %v1502 = vunpack.c.l.s4 1983009808
        %v1503 = vunpack.c.0.s8 %v1502
        %v1504 = vlaneseq
        %v1505 = vshrl.u32 %v1504, 7
        %v1506 = vsub.s32 %v1503, %v1505
        %v1507 = vrot.slane %v1499, %v1506
        %v1509 = vunpack.c.l.s4 1983009808
        %v1510 = vunpack.c.0.s8 %v1509
        %v1511 = vlaneseq
        %v1512 = vshrl.u32 %v1511, 7
        %v1513 = vsub.s32 %v1510, %v1512
        %v1514 = vrot.slane %v1500, %v1513
        %v1515 = vcombine.low %v1071, %v1073
        %v1516 = vcombine.high %v1071, %v1073
        %v1518 = vunpack.c.l.s4 1983009808
        %v1519 = vunpack.c.0.s8 %v1518
        %v1520 = vlaneseq
        %v1521 = vshrl.u32 %v1520, 7
        %v1522 = vsub.s32 %v1519, %v1521
        %v1523 = vrot.slane %v1515, %v1522
        %v1525 = vunpack.c.l.s4 1983009808
        %v1526 = vunpack.c.0.s8 %v1525
        %v1527 = vlaneseq
        %v1528 = vshrl.u32 %v1527, 7
        %v1529 = vsub.s32 %v1526, %v1528
        %v1530 = vrot.slane %v1516, %v1529
        %v1531 = vcombine.low %v1072, %v1074
        %v1532 = vcombine.high %v1072, %v1074
        %v1534 = vunpack.c.l.s4 1983009808
        %v1535 = vunpack.c.0.s8 %v1534
        %v1536 = vlaneseq
        %v1537 = vshrl.u32 %v1536, 7
        %v1538 = vsub.s32 %v1535, %v1537
        %v1539 = vrot.slane %v1531, %v1538
        %v1541 = vunpack.c.l.s4 1983009808
        %v1542 = vunpack.c.0.s8 %v1541
        %v1543 = vlaneseq
        %v1544 = vshrl.u32 %v1543, 7
        %v1545 = vsub.s32 %v1542, %v1544
        %v1546 = vrot.slane %v1532, %v1545
        %v1547 = vcombine.low %v1491, %v1507
        %v1548 = vcombine.high %v1491, %v1507
        %v1550 = vunpack.c.l.s4 1934713408
        %v1551 = vunpack.c.0.s8 %v1550
        %v1552 = vlaneseq
        %v1553 = vshrl.u32 %v1552, 7
        %v1554 = vsub.s32 %v1551, %v1553
        %v1555 = vrot.slane %v1547, %v1554
        %v1557 = vunpack.c.l.s4 1934713408
        %v1558 = vunpack.c.0.s8 %v1557
        %v1559 = vlaneseq
        %v1560 = vshrl.u32 %v1559, 7
        %v1561 = vsub.s32 %v1558, %v1560
        %v1562 = vrot.slane %v1548, %v1561
        %v1563 = vcombine.low %v1498, %v1514
        %v1564 = vcombine.high %v1498, %v1514
        %v1566 = vunpack.c.l.s4 1934713408
        %v1567 = vunpack.c.0.s8 %v1566
        %v1568 = vlaneseq
        %v1569 = vshrl.u32 %v1568, 7
        %v1570 = vsub.s32 %v1567, %v1569
        %v1571 = vrot.slane %v1563, %v1570
        %v1573 = vunpack.c.l.s4 1934713408
        %v1574 = vunpack.c.0.s8 %v1573
        %v1575 = vlaneseq
        %v1576 = vshrl.u32 %v1575, 7
        %v1577 = vsub.s32 %v1574, %v1576
        %v1578 = vrot.slane %v1564, %v1577
        %v1579 = vcombine.low %v1523, %v1539
        %v1580 = vcombine.high %v1523, %v1539
        %v1582 = vunpack.c.l.s4 1934713408
        %v1583 = vunpack.c.0.s8 %v1582
        %v1584 = vlaneseq
        %v1585 = vshrl.u32 %v1584, 7
        %v1586 = vsub.s32 %v1583, %v1585
        %v1587 = vrot.slane %v1579, %v1586
        %v1589 = vunpack.c.l.s4 1934713408
        %v1590 = vunpack.c.0.s8 %v1589
        %v1591 = vlaneseq
        %v1592 = vshrl.u32 %v1591, 7
        %v1593 = vsub.s32 %v1590, %v1592
        %v1594 = vrot.slane %v1580, %v1593
        %v1595 = vcombine.low %v1530, %v1546
        %v1596 = vcombine.high %v1530, %v1546
        %v1598 = vunpack.c.l.s4 1934713408
        %v1599 = vunpack.c.0.s8 %v1598
        %v1600 = vlaneseq
        %v1601 = vshrl.u32 %v1600, 7
        %v1602 = vsub.s32 %v1599, %v1601
        %v1603 = vrot.slane %v1595, %v1602
        %v1605 = vunpack.c.l.s4 1934713408
        %v1606 = vunpack.c.0.s8 %v1605
        %v1607 = vlaneseq
        %v1608 = vshrl.u32 %v1607, 7
        %v1609 = vsub.s32 %v1606, %v1608
        %v1610 = vrot.slane %v1596, %v1609
        %v1611 = vcombine.low %v1555, %v1587
        %v1612 = vcombine.high %v1555, %v1587
        %v1613 = vcombine.low %v1562, %v1594
        %v1614 = vcombine.high %v1562, %v1594
        %v1615 = vcombine.low %v1571, %v1603
        %v1616 = vcombine.high %v1571, %v1603
        %v1617 = vcombine.low %v1578, %v1610
        %v1618 = vcombine.high %v1578, %v1610
        %v1619 = vcombine.low %v1339, %v1341
        %v1620 = vcombine.high %v1339, %v1341
        %v1622 = vunpack.c.l.s4 1983009808
        %v1623 = vunpack.c.0.s8 %v1622
        %v1624 = vlaneseq
        %v1625 = vshrl.u32 %v1624, 7
        %v1626 = vsub.s32 %v1623, %v1625
        %v1627 = vrot.slane %v1619, %v1626
        %v1629 = vunpack.c.l.s4 1983009808
        %v1630 = vunpack.c.0.s8 %v1629
        %v1631 = vlaneseq
        %v1632 = vshrl.u32 %v1631, 7
        %v1633 = vsub.s32 %v1630, %v1632
        %v1634 = vrot.slane %v1620, %v1633
        %v1635 = vcombine.low %v1340, %v1342
        %v1636 = vcombine.high %v1340, %v1342
        %v1638 = vunpack.c.l.s4 1983009808
        %v1639 = vunpack.c.0.s8 %v1638
        %v1640 = vlaneseq
        %v1641 = vshrl.u32 %v1640, 7
        %v1642 = vsub.s32 %v1639, %v1641
        %v1643 = vrot.slane %v1635, %v1642
        %v1645 = vunpack.c.l.s4 1983009808
        %v1646 = vunpack.c.0.s8 %v1645
        %v1647 = vlaneseq
        %v1648 = vshrl.u32 %v1647, 7
        %v1649 = vsub.s32 %v1646, %v1648
        %v1650 = vrot.slane %v1636, %v1649
        %v1651 = vcombine.low %v1343, %v1345
        %v1652 = vcombine.high %v1343, %v1345
        %v1654 = vunpack.c.l.s4 1983009808
        %v1655 = vunpack.c.0.s8 %v1654
        %v1656 = vlaneseq
        %v1657 = vshrl.u32 %v1656, 7
        %v1658 = vsub.s32 %v1655, %v1657
        %v1659 = vrot.slane %v1651, %v1658
        %v1661 = vunpack.c.l.s4 1983009808
        %v1662 = vunpack.c.0.s8 %v1661
        %v1663 = vlaneseq
        %v1664 = vshrl.u32 %v1663, 7
        %v1665 = vsub.s32 %v1662, %v1664
        %v1666 = vrot.slane %v1652, %v1665
        %v1667 = vcombine.low %v1344, %v1346
        %v1668 = vcombine.high %v1344, %v1346
        %v1670 = vunpack.c.l.s4 1983009808
        %v1671 = vunpack.c.0.s8 %v1670
        %v1672 = vlaneseq
        %v1673 = vshrl.u32 %v1672, 7
        %v1674 = vsub.s32 %v1671, %v1673
        %v1675 = vrot.slane %v1667, %v1674
        %v1677 = vunpack.c.l.s4 1983009808
        %v1678 = vunpack.c.0.s8 %v1677
        %v1679 = vlaneseq
        %v1680 = vshrl.u32 %v1679, 7
        %v1681 = vsub.s32 %v1678, %v1680
        %v1682 = vrot.slane %v1668, %v1681
        %v1683 = vcombine.low %v1627, %v1643
        %v1684 = vcombine.high %v1627, %v1643
        %v1686 = vunpack.c.l.s4 1934713408
        %v1687 = vunpack.c.0.s8 %v1686
        %v1688 = vlaneseq
        %v1689 = vshrl.u32 %v1688, 7
        %v1690 = vsub.s32 %v1687, %v1689
        %v1691 = vrot.slane %v1683, %v1690
        %v1693 = vunpack.c.l.s4 1934713408
        %v1694 = vunpack.c.0.s8 %v1693
        %v1695 = vlaneseq
        %v1696 = vshrl.u32 %v1695, 7
        %v1697 = vsub.s32 %v1694, %v1696
        %v1698 = vrot.slane %v1684, %v1697
        %v1699 = vcombine.low %v1634, %v1650
        %v1700 = vcombine.high %v1634, %v1650
        %v1702 = vunpack.c.l.s4 1934713408
        %v1703 = vunpack.c.0.s8 %v1702
        %v1704 = vlaneseq
        %v1705 = vshrl.u32 %v1704, 7
        %v1706 = vsub.s32 %v1703, %v1705
        %v1707 = vrot.slane %v1699, %v1706
        %v1709 = vunpack.c.l.s4 1934713408
        %v1710 = vunpack.c.0.s8 %v1709
        %v1711 = vlaneseq
        %v1712 = vshrl.u32 %v1711, 7
        %v1713 = vsub.s32 %v1710, %v1712
        %v1714 = vrot.slane %v1700, %v1713
        %v1715 = vcombine.low %v1659, %v1675
        %v1716 = vcombine.high %v1659, %v1675
        %v1718 = vunpack.c.l.s4 1934713408
        %v1719 = vunpack.c.0.s8 %v1718
        %v1720 = vlaneseq
        %v1721 = vshrl.u32 %v1720, 7
        %v1722 = vsub.s32 %v1719, %v1721
        %v1723 = vrot.slane %v1715, %v1722
        %v1725 = vunpack.c.l.s4 1934713408
        %v1726 = vunpack.c.0.s8 %v1725
        %v1727 = vlaneseq
        %v1728 = vshrl.u32 %v1727, 7
        %v1729 = vsub.s32 %v1726, %v1728
        %v1730 = vrot.slane %v1716, %v1729
        %v1731 = vcombine.low %v1666, %v1682
        %v1732 = vcombine.high %v1666, %v1682
        %v1734 = vunpack.c.l.s4 1934713408
        %v1735 = vunpack.c.0.s8 %v1734
        %v1736 = vlaneseq
        %v1737 = vshrl.u32 %v1736, 7
        %v1738 = vsub.s32 %v1735, %v1737
        %v1739 = vrot.slane %v1731, %v1738
        %v1741 = vunpack.c.l.s4 1934713408
        %v1742 = vunpack.c.0.s8 %v1741
        %v1743 = vlaneseq
        %v1744 = vshrl.u32 %v1743, 7
        %v1745 = vsub.s32 %v1742, %v1744
        %v1746 = vrot.slane %v1732, %v1745
        %v1747 = vcombine.low %v1691, %v1723
        %v1748 = vcombine.high %v1691, %v1723
        %v1749 = vcombine.low %v1698, %v1730
        %v1750 = vcombine.high %v1698, %v1730
        %v1751 = vcombine.low %v1707, %v1739
        %v1752 = vcombine.high %v1707, %v1739
        %v1753 = vcombine.low %v1714, %v1746
        %v1754 = vcombine.high %v1714, %v1746
        %v1755 = vcombine.low %v1203, %v1205
        %v1756 = vcombine.high %v1203, %v1205
        %v1758 = vunpack.c.l.s4 1983009808
        %v1759 = vunpack.c.0.s8 %v1758
        %v1760 = vlaneseq
        %v1761 = vshrl.u32 %v1760, 7
        %v1762 = vsub.s32 %v1759, %v1761
        %v1763 = vrot.slane %v1755, %v1762
        %v1765 = vunpack.c.l.s4 1983009808
        %v1766 = vunpack.c.0.s8 %v1765
        %v1767 = vlaneseq
        %v1768 = vshrl.u32 %v1767, 7
        %v1769 = vsub.s32 %v1766, %v1768
        %v1770 = vrot.slane %v1756, %v1769
        %v1771 = vcombine.low %v1204, %v1206
        %v1772 = vcombine.high %v1204, %v1206
        %v1774 = vunpack.c.l.s4 1983009808
        %v1775 = vunpack.c.0.s8 %v1774
        %v1776 = vlaneseq
        %v1777 = vshrl.u32 %v1776, 7
        %v1778 = vsub.s32 %v1775, %v1777
        %v1779 = vrot.slane %v1771, %v1778
        %v1781 = vunpack.c.l.s4 1983009808
        %v1782 = vunpack.c.0.s8 %v1781
        %v1783 = vlaneseq
        %v1784 = vshrl.u32 %v1783, 7
        %v1785 = vsub.s32 %v1782, %v1784
        %v1786 = vrot.slane %v1772, %v1785
        %v1787 = vcombine.low %v1207, %v1209
        %v1788 = vcombine.high %v1207, %v1209
        %v1790 = vunpack.c.l.s4 1983009808
        %v1791 = vunpack.c.0.s8 %v1790
        %v1792 = vlaneseq
        %v1793 = vshrl.u32 %v1792, 7
        %v1794 = vsub.s32 %v1791, %v1793
        %v1795 = vrot.slane %v1787, %v1794
        %v1797 = vunpack.c.l.s4 1983009808
        %v1798 = vunpack.c.0.s8 %v1797
        %v1799 = vlaneseq
        %v1800 = vshrl.u32 %v1799, 7
        %v1801 = vsub.s32 %v1798, %v1800
        %v1802 = vrot.slane %v1788, %v1801
        %v1803 = vcombine.low %v1208, %v1210
        %v1804 = vcombine.high %v1208, %v1210
        %v1806 = vunpack.c.l.s4 1983009808
        %v1807 = vunpack.c.0.s8 %v1806
        %v1808 = vlaneseq
        %v1809 = vshrl.u32 %v1808, 7
        %v1810 = vsub.s32 %v1807, %v1809
        %v1811 = vrot.slane %v1803, %v1810
        %v1813 = vunpack.c.l.s4 1983009808
        %v1814 = vunpack.c.0.s8 %v1813
        %v1815 = vlaneseq
        %v1816 = vshrl.u32 %v1815, 7
        %v1817 = vsub.s32 %v1814, %v1816
        %v1818 = vrot.slane %v1804, %v1817
        %v1819 = vcombine.low %v1763, %v1779
        %v1820 = vcombine.high %v1763, %v1779
        %v1822 = vunpack.c.l.s4 1934713408
        %v1823 = vunpack.c.0.s8 %v1822
        %v1824 = vlaneseq
        %v1825 = vshrl.u32 %v1824, 7
        %v1826 = vsub.s32 %v1823, %v1825
        %v1827 = vrot.slane %v1819, %v1826
        %v1829 = vunpack.c.l.s4 1934713408
        %v1830 = vunpack.c.0.s8 %v1829
        %v1831 = vlaneseq
        %v1832 = vshrl.u32 %v1831, 7
        %v1833 = vsub.s32 %v1830, %v1832
        %v1834 = vrot.slane %v1820, %v1833
        %v1835 = vcombine.low %v1770, %v1786
        %v1836 = vcombine.high %v1770, %v1786
        %v1838 = vunpack.c.l.s4 1934713408
        %v1839 = vunpack.c.0.s8 %v1838
        %v1840 = vlaneseq
        %v1841 = vshrl.u32 %v1840, 7
        %v1842 = vsub.s32 %v1839, %v1841
        %v1843 = vrot.slane %v1835, %v1842
        %v1845 = vunpack.c.l.s4 1934713408
        %v1846 = vunpack.c.0.s8 %v1845
        %v1847 = vlaneseq
        %v1848 = vshrl.u32 %v1847, 7
        %v1849 = vsub.s32 %v1846, %v1848
        %v1850 = vrot.slane %v1836, %v1849
        %v1851 = vcombine.low %v1795, %v1811
        %v1852 = vcombine.high %v1795, %v1811
        %v1854 = vunpack.c.l.s4 1934713408
        %v1855 = vunpack.c.0.s8 %v1854
        %v1856 = vlaneseq
        %v1857 = vshrl.u32 %v1856, 7
        %v1858 = vsub.s32 %v1855, %v1857
        %v1859 = vrot.slane %v1851, %v1858
        %v1861 = vunpack.c.l.s4 1934713408
        %v1862 = vunpack.c.0.s8 %v1861
        %v1863 = vlaneseq
        %v1864 = vshrl.u32 %v1863, 7
        %v1865 = vsub.s32 %v1862, %v1864
        %v1866 = vrot.slane %v1852, %v1865
        %v1867 = vcombine.low %v1802, %v1818
        %v1868 = vcombine.high %v1802, %v1818
        %v1870 = vunpack.c.l.s4 1934713408
        %v1871 = vunpack.c.0.s8 %v1870
        %v1872 = vlaneseq
        %v1873 = vshrl.u32 %v1872, 7
        %v1874 = vsub.s32 %v1871, %v1873
        %v1875 = vrot.slane %v1867, %v1874
        %v1877 = vunpack.c.l.s4 1934713408
        %v1878 = vunpack.c.0.s8 %v1877
        %v1879 = vlaneseq
        %v1880 = vshrl.u32 %v1879, 7
        %v1881 = vsub.s32 %v1878, %v1880
        %v1882 = vrot.slane %v1868, %v1881
        %v1883 = vcombine.low %v1827, %v1859
        %v1884 = vcombine.high %v1827, %v1859
        %v1885 = vcombine.low %v1834, %v1866
        %v1886 = vcombine.high %v1834, %v1866
        %v1887 = vcombine.low %v1843, %v1875
        %v1888 = vcombine.high %v1843, %v1875
        %v1889 = vcombine.low %v1850, %v1882
        %v1890 = vcombine.high %v1850, %v1882
        %v1891 = vcombine.low %v1475, %v1477
        %v1892 = vcombine.high %v1475, %v1477
        %v1894 = vunpack.c.l.s4 1983009808
        %v1895 = vunpack.c.0.s8 %v1894
        %v1896 = vlaneseq
        %v1897 = vshrl.u32 %v1896, 7
        %v1898 = vsub.s32 %v1895, %v1897
        %v1899 = vrot.slane %v1891, %v1898
        %v1901 = vunpack.c.l.s4 1983009808
        %v1902 = vunpack.c.0.s8 %v1901
        %v1903 = vlaneseq
        %v1904 = vshrl.u32 %v1903, 7
        %v1905 = vsub.s32 %v1902, %v1904
        %v1906 = vrot.slane %v1892, %v1905
        %v1907 = vcombine.low %v1476, %v1478
        %v1908 = vcombine.high %v1476, %v1478
        %v1910 = vunpack.c.l.s4 1983009808
        %v1911 = vunpack.c.0.s8 %v1910
        %v1912 = vlaneseq
        %v1913 = vshrl.u32 %v1912, 7
        %v1914 = vsub.s32 %v1911, %v1913
        %v1915 = vrot.slane %v1907, %v1914
        %v1917 = vunpack.c.l.s4 1983009808
        %v1918 = vunpack.c.0.s8 %v1917
        %v1919 = vlaneseq
        %v1920 = vshrl.u32 %v1919, 7
        %v1921 = vsub.s32 %v1918, %v1920
        %v1922 = vrot.slane %v1908, %v1921
        %v1923 = vcombine.low %v1479, %v1481
        %v1924 = vcombine.high %v1479, %v1481
        %v1926 = vunpack.c.l.s4 1983009808
        %v1927 = vunpack.c.0.s8 %v1926
        %v1928 = vlaneseq
        %v1929 = vshrl.u32 %v1928, 7
        %v1930 = vsub.s32 %v1927, %v1929
        %v1931 = vrot.slane %v1923, %v1930
        %v1933 = vunpack.c.l.s4 1983009808
        %v1934 = vunpack.c.0.s8 %v1933
        %v1935 = vlaneseq
        %v1936 = vshrl.u32 %v1935, 7
        %v1937 = vsub.s32 %v1934, %v1936
        %v1938 = vrot.slane %v1924, %v1937
        %v1939 = vcombine.low %v1480, %v1482
        %v1940 = vcombine.high %v1480, %v1482
        %v1942 = vunpack.c.l.s4 1983009808
        %v1943 = vunpack.c.0.s8 %v1942
        %v1944 = vlaneseq
        %v1945 = vshrl.u32 %v1944, 7
        %v1946 = vsub.s32 %v1943, %v1945
        %v1947 = vrot.slane %v1939, %v1946
        %v1949 = vunpack.c.l.s4 1983009808
        %v1950 = vunpack.c.0.s8 %v1949
        %v1951 = vlaneseq
        %v1952 = vshrl.u32 %v1951, 7
        %v1953 = vsub.s32 %v1950, %v1952
        %v1954 = vrot.slane %v1940, %v1953
        %v1955 = vcombine.low %v1899, %v1915
        %v1956 = vcombine.high %v1899, %v1915
        %v1958 = vunpack.c.l.s4 1934713408
        %v1959 = vunpack.c.0.s8 %v1958
        %v1960 = vlaneseq
        %v1961 = vshrl.u32 %v1960, 7
        %v1962 = vsub.s32 %v1959, %v1961
        %v1963 = vrot.slane %v1955, %v1962
        %v1965 = vunpack.c.l.s4 1934713408
        %v1966 = vunpack.c.0.s8 %v1965
        %v1967 = vlaneseq
        %v1968 = vshrl.u32 %v1967, 7
        %v1969 = vsub.s32 %v1966, %v1968
        %v1970 = vrot.slane %v1956, %v1969
        %v1971 = vcombine.low %v1906, %v1922
        %v1972 = vcombine.high %v1906, %v1922
        %v1974 = vunpack.c.l.s4 1934713408
        %v1975 = vunpack.c.0.s8 %v1974
        %v1976 = vlaneseq
        %v1977 = vshrl.u32 %v1976, 7
        %v1978 = vsub.s32 %v1975, %v1977
        %v1979 = vrot.slane %v1971, %v1978
        %v1981 = vunpack.c.l.s4 1934713408
        %v1982 = vunpack.c.0.s8 %v1981
        %v1983 = vlaneseq
        %v1984 = vshrl.u32 %v1983, 7
        %v1985 = vsub.s32 %v1982, %v1984
        %v1986 = vrot.slane %v1972, %v1985
        %v1987 = vcombine.low %v1931, %v1947
        %v1988 = vcombine.high %v1931, %v1947
        %v1990 = vunpack.c.l.s4 1934713408
        %v1991 = vunpack.c.0.s8 %v1990
        %v1992 = vlaneseq
        %v1993 = vshrl.u32 %v1992, 7
        %v1994 = vsub.s32 %v1991, %v1993
        %v1995 = vrot.slane %v1987, %v1994
        %v1997 = vunpack.c.l.s4 1934713408
        %v1998 = vunpack.c.0.s8 %v1997
        %v1999 = vlaneseq
        %v2000 = vshrl.u32 %v1999, 7
        %v2001 = vsub.s32 %v1998, %v2000
        %v2002 = vrot.slane %v1988, %v2001
        %v2003 = vcombine.low %v1938, %v1954
        %v2004 = vcombine.high %v1938, %v1954
        %v2006 = vunpack.c.l.s4 1934713408
        %v2007 = vunpack.c.0.s8 %v2006
        %v2008 = vlaneseq
        %v2009 = vshrl.u32 %v2008, 7
        %v2010 = vsub.s32 %v2007, %v2009
        %v2011 = vrot.slane %v2003, %v2010
        %v2013 = vunpack.c.l.s4 1934713408
        %v2014 = vunpack.c.0.s8 %v2013
        %v2015 = vlaneseq
        %v2016 = vshrl.u32 %v2015, 7
        %v2017 = vsub.s32 %v2014, %v2016
        %v2018 = vrot.slane %v2004, %v2017
        %v2019 = vcombine.low %v1963, %v1995
        %v2020 = vcombine.high %v1963, %v1995
        %v2021 = vcombine.low %v1970, %v2002
        %v2022 = vcombine.high %v1970, %v2002
        %v2023 = vcombine.low %v1979, %v2011
        %v2024 = vcombine.high %v1979, %v2011
        %v2025 = vcombine.low %v1986, %v2018
        %v2026 = vcombine.high %v1986, %v2018
        %2029 = vrot.lane.b32.xlu0 %v1612, 4
        %v2030 = vpop.permute.xlu0 %2029
        %2031 = vrot.lane.b32.xlu0 %v1748, 4
        %v2032 = vpop.permute.xlu0 %2031
        %2037 = vrot.lane.b32.xlu0 %v1613, 8
        %v2038 = vpop.permute.xlu0 %2037
        %2039 = vrot.lane.b32.xlu0 %v1749, 8
        %v2040 = vpop.permute.xlu0 %2039
        %2045 = vrot.lane.b32.xlu0 %v1614, 12
        %v2046 = vpop.permute.xlu0 %2045
        %2047 = vrot.lane.b32.xlu0 %v1750, 12
        %v2048 = vpop.permute.xlu0 %2047
        %2053 = vrot.lane.b32.xlu0 %v1615, 16
        %v2054 = vpop.permute.xlu0 %2053
        %2055 = vrot.lane.b32.xlu0 %v1751, 16
        %v2056 = vpop.permute.xlu0 %2055
        %2061 = vrot.lane.b32.xlu0 %v1616, 20
        %v2062 = vpop.permute.xlu0 %2061
        %2063 = vrot.lane.b32.xlu0 %v1752, 20
        %v2064 = vpop.permute.xlu0 %2063
        %2069 = vrot.lane.b32.xlu0 %v1617, 24
        %v2070 = vpop.permute.xlu0 %2069
        %2071 = vrot.lane.b32.xlu0 %v1753, 24
        %v2072 = vpop.permute.xlu0 %2071
        %2077 = vrot.lane.b32.xlu0 %v1618, 28
        %v2078 = vpop.permute.xlu0 %2077
        %2079 = vrot.lane.b32.xlu0 %v1754, 28
        %v2080 = vpop.permute.xlu0 %2079
        %2085 = vrot.lane.b32.xlu0 %v1883, 32
        %v2086 = vpop.permute.xlu0 %2085
        %2087 = vrot.lane.b32.xlu0 %v2019, 32
        %v2088 = vpop.permute.xlu0 %2087
        %2093 = vrot.lane.b32.xlu0 %v1884, 36
        %v2094 = vpop.permute.xlu0 %2093
        %2095 = vrot.lane.b32.xlu0 %v2020, 36
        %v2096 = vpop.permute.xlu0 %2095
        %2101 = vrot.lane.b32.xlu0 %v1885, 40
        %v2102 = vpop.permute.xlu0 %2101
        %2103 = vrot.lane.b32.xlu0 %v2021, 40
        %v2104 = vpop.permute.xlu0 %2103
        %2109 = vrot.lane.b32.xlu0 %v1886, 44
        %v2110 = vpop.permute.xlu0 %2109
        %2111 = vrot.lane.b32.xlu0 %v2022, 44
        %v2112 = vpop.permute.xlu0 %2111
        %2117 = vrot.lane.b32.xlu0 %v1887, 48
        %v2118 = vpop.permute.xlu0 %2117
        %2119 = vrot.lane.b32.xlu0 %v2023, 48
        %v2120 = vpop.permute.xlu0 %2119
        %2125 = vrot.lane.b32.xlu0 %v1888, 52
        %v2126 = vpop.permute.xlu0 %2125
        %2127 = vrot.lane.b32.xlu0 %v2024, 52
        %v2128 = vpop.permute.xlu0 %2127
        %2133 = vrot.lane.b32.xlu0 %v1889, 56
        %v2134 = vpop.permute.xlu0 %2133
        %2135 = vrot.lane.b32.xlu0 %v2025, 56
        %v2136 = vpop.permute.xlu0 %2135
        %2141 = vrot.lane.b32.xlu0 %v1890, 60
        %v2142 = vpop.permute.xlu0 %2141
        %2143 = vrot.lane.b32.xlu0 %v2026, 60
        %v2144 = vpop.permute.xlu0 %2143
        %vm2147 = vcmask 31744
        %v2148 = vsel %vm2147, %v1611, %v2030
        %v2149 = vsel %vm2147, %v1747, %v2032
        %vm2150 = vcmask 64512
        %v2151 = vsel %vm2150, %v2148, %v2038
        %v2152 = vsel %vm2150, %v2149, %v2040
        %vm2153 = vcmask 97280
        %v2154 = vsel %vm2153, %v2151, %v2046
        %v2155 = vsel %vm2153, %v2152, %v2048
        %vm2156 = vcmask 130048
        %v2157 = vsel %vm2156, %v2154, %v2054
        %v2158 = vsel %vm2156, %v2155, %v2056
        %vm2159 = vcmask 162816
        %v2160 = vsel %vm2159, %v2157, %v2062
        %v2161 = vsel %vm2159, %v2158, %v2064
        %vm2162 = vcmask 195584
        %v2163 = vsel %vm2162, %v2160, %v2070
        %v2164 = vsel %vm2162, %v2161, %v2072
        %vm2165 = vcmask 228352
        %v2166 = vsel %vm2165, %v2163, %v2078
        %v2167 = vsel %vm2165, %v2164, %v2080
        %vm2168 = vcmask 261120
        %v2169 = vsel %vm2168, %v2166, %v2086
        %v2170 = vsel %vm2168, %v2167, %v2088
        %vm2171 = vcmask 293888
        %v2172 = vsel %vm2171, %v2169, %v2094
        %v2173 = vsel %vm2171, %v2170, %v2096
        %vm2174 = vcmask 326656
        %v2175 = vsel %vm2174, %v2172, %v2102
        %v2176 = vsel %vm2174, %v2173, %v2104
        %vm2177 = vcmask 359424
        %v2178 = vsel %vm2177, %v2175, %v2110
        %v2179 = vsel %vm2177, %v2176, %v2112
        %vm2180 = vcmask 392192
        %v2181 = vsel %vm2180, %v2178, %v2118
        %v2182 = vsel %vm2180, %v2179, %v2120
        %vm2183 = vcmask 424960
        %v2184 = vsel %vm2183, %v2181, %v2126
        %v2185 = vsel %vm2183, %v2182, %v2128
        %vm2186 = vcmask 457728
        %v2187 = vsel %vm2186, %v2184, %v2134
        %v2188 = vsel %vm2186, %v2185, %v2136
        %vm2189 = vcmask 490496
        %v2190 = vsel %vm2189, %v2187, %v2142
        %v2191 = vsel %vm2189, %v2188, %v2144
        %vm2192 = vcmask 523264
        %2193 = vst.msk [vmem:[%s152] sm:$0xff] %vm2192, %v2190
        %2194 = vst.msk [vmem:[%s152 + $0x8] sm:$0xff] %vm2192, %v2191
        %s2195 = sand.u32 %s68, 1
        %s2196 = scalar_lea.sflag [#allocation4], %s2195
        %s2197 = sand.u32 %s68, 1
        %s2198 = smul.addr %s2197, 16
        %s2199 = scalar_lea.vmem [#allocation5], %s2198
        // Predicated region
        $region29: #{tpu_custom_call.1} parent=23 // pred_check
          %p2200 = pneg %p78
        $region30: #{tpu_custom_call.1} parent=23 // pred_check_branch
          %2202 = sbr.rel (%p2200) target = $region32
        $region31: #{tpu_custom_call.1} parent=23 // pred_region
          %s2203 = smul.u32 2, %s23
          %s2205 = ssub.s32 256, 256
          %2206 = vsyncadd %s2196, %s2205
          %s2207 = smul.addr %s22, 2
          %s2208 = sadd.s32 %s2203, %s2207
          %s2209 = smul.addr %s2208, 128
          %s2210 = scalar_lea.hbm %s1, %s2209
          %s2211 = sshll.u32 %s2199, 4
          %s2212 = int_to_ptr.vmem [resolvable:$true] %s2211
          %2217 = dma.vmem_to_hbm [thread:$0]  %s2212, 256, %s2210, %s2196, 128, 128, 8
        $region32: #{tpu_custom_call.1} parent=23 // pred_fallthru
          _
      $region24: #{tpu_custom_call.1} parent=5 // pred_fallthru
        _
      %p2218 = scmp.le.s32.totalorder 2, %s13
      // Predicated region
      $region33: #{tpu_custom_call.1} parent=5 // pred_check
        %p2219 = pneg %p2218
      $region34: #{tpu_custom_call.1} parent=5 // pred_check_branch
        %2221 = sbr.rel (%p2219) target = $region36
      $region35: #{tpu_custom_call.1} parent=5 // pred_region
        %s2222 = ssub.s32 %s13, 2
        // Predicated region
        $region37: #{tpu_custom_call.1} parent=35 // pred_check
          %p2223 = pneg %p84
        $region38: #{tpu_custom_call.1} parent=35 // pred_check_branch
          %2225 = sbr.rel (%p2223) target = $region40
        $region39: #{tpu_custom_call.1} parent=35 // pred_region
          %s2226 = sand.u32 %s69, 1
          %s2227 = scalar_lea.sflag [#allocation4], %s2226
          %s2228 = sand.u32 %s69, 1
          %s2229 = smul.addr %s2228, 16
          %s2230 = scalar_lea.vmem [#allocation5], %s2229
          %2231 = dma.done %s2227, 256
        $region40: #{tpu_custom_call.1} parent=35 // pred_fallthru
          _
      $region36: #{tpu_custom_call.1} parent=5 // pred_fallthru
        _
    $region6: #{tpu_custom_call.1} parent=1 // loop_footer
      %s17 = sadd.s32 1, %s13
    $region7: #{tpu_custom_call.1} parent=1 // loop_footer_branch
      %12 = sbr.rel target = $region3
    $region8: #{tpu_custom_call.1} parent=1 // loop_exit
      _
    %2232 = vsyncpa [#allocation3], 1
    %s2233 = scalar_lea.sflag [#allocation3], 1
    %2234 = vsyncpa %s2233, 1
    %2235 = vsyncpa [#allocation4], 1
    %s2236 = scalar_lea.sflag [#allocation4], 1
    %2237 = vsyncpa %s2236, 1

</llo_original>
